<compile_context>
chip_gen: v5e
topology: v5e:2x2
jax: 0.10.0
libtpu: 0.0.40
codegen_flags: <defaults>
</compile_context>

<pallas_src>
import functools

import jax
import jax.numpy as jnp
from jax import lax
from jax.experimental import pallas as pl
from jax.experimental.pallas import tpu as pltpu

# ------------------------- model sizes (case study) -------------------------
IN_DIM = 256       # DECODER.IN_DIM  (== BAN h_dim)
HIDDEN_DIM = 512   # DECODER.HIDDEN_DIM
OUT_DIM = 128      # DECODER.OUT_DIM
BINARY = 1         # DECODER.BINARY
BN_EPS = 1e-5
SUBLANE = 8


def _round_up(x, m):
    return ((x + m - 1) // m) * m


# ------------------------------ fused kernel --------------------------------
def _mlp_decoder_kernel(x_ref, w1_ref, w2_ref, w3_ref, w4_ref, bias_ref,
                        b4_ref, o_ref):
    """Whole decoder for one (tb, IN_DIM) row block; intermediates stay in VMEM.

    BN has been folded offline, so each hidden layer is: relu(h @ Wi' + bi').
    The final fc4 is a (binary, out) x (tb, out)^T contraction producing the
    score row lane-major, matching the (binary, tb) output block.
    """
    hid = w1_ref.shape[1]
    out = w3_ref.shape[1]

    b1 = bias_ref[:, 0:hid]
    b2 = bias_ref[:, hid:2 * hid]
    b3 = bias_ref[:, 2 * hid:2 * hid + out]

    h = x_ref[...].astype(jnp.bfloat16)

    h = jnp.dot(h, w1_ref[...], preferred_element_type=jnp.float32) + b1
    h = jnp.maximum(h, 0.0).astype(jnp.bfloat16)

    h = jnp.dot(h, w2_ref[...], preferred_element_type=jnp.float32) + b2
    h = jnp.maximum(h, 0.0).astype(jnp.bfloat16)

    h = jnp.dot(h, w3_ref[...], preferred_element_type=jnp.float32) + b3
    h = jnp.maximum(h, 0.0).astype(jnp.bfloat16)

    # fc4: (binary, out) contracted with (tb, out) on the last dim -> (binary, tb)
    y = lax.dot_general(w4_ref[...], h, (((1,), (1,)), ((), ())),
                        preferred_element_type=jnp.float32)
    o_ref[...] = y + b4_ref[0, 0]


def mlp_decoder(kparams, x, *, block_rows=512):
    """x: (B, IN_DIM) float32 (or bfloat16) -> (B, BINARY) float32."""
    B, in_dim = x.shape
    hid = kparams['w1'].shape[1]
    out = kparams['w3'].shape[1]
    binary = kparams['w4r'].shape[0]
    assert binary == 1  # TODO(synk): binary > 1 not supported by this head.

    # Batch tile: sublane-aligned, capped by block_rows (sweep 256-1024).
    tb = min(block_rows, _round_up(B, SUBLANE))
    tb = _round_up(tb, SUBLANE)
    Bp = _round_up(B, tb)
    if Bp != B:
        x = jnp.pad(x, ((0, Bp - B), (0, 0)))

    rep = lambda i: (0, 0)   # weights / packed bias: one resident block

    out_row = pl.pallas_call(
        _mlp_decoder_kernel,
        grid=(Bp // tb,),
        in_specs=[
            pl.BlockSpec((tb, in_dim), lambda i: (i, 0)),       # x rows
            pl.BlockSpec((in_dim, hid), rep),                   # W1
            pl.BlockSpec((hid, hid), rep),                      # W2'
            pl.BlockSpec((hid, out), rep),                      # W3'
            pl.BlockSpec((binary, out), rep),                   # W4'^T
            pl.BlockSpec((1, 2 * hid + out), rep),              # packed b1|b2'|b3'
            pl.BlockSpec(memory_space=pltpu.MemorySpace.SMEM),  # scalar b4'
        ],
        out_specs=pl.BlockSpec((binary, tb), lambda i: (0, i)),  # lane-major scores
        out_shape=jax.ShapeDtypeStruct((binary, Bp), jnp.float32),
        compiler_params=pltpu.CompilerParams(
            dimension_semantics=(pltpu.PARALLEL,)),
    )(x, kparams['w1'], kparams['w2'], kparams['w3'], kparams['w4r'],
      kparams['bias'], kparams['b4'])

    # (binary, Bp) -> (B, binary); trivial relayout for binary == 1.
    return out_row[:, :B].T


# ------------------------------- parameters ---------------------------------
def make_raw_params(key, in_dim=IN_DIM, hidden_dim=HIDDEN_DIM,
                    out_dim=OUT_DIM, binary=BINARY):
    """f32 PyTorch-equivalent parameters (linear weights, biases, BN stats)."""
    keys = iter(jax.random.split(key, 24))

    def linear(fan_in, fan_out):
        bound = 1.0 / (fan_in ** 0.5)
        w = jax.random.uniform(next(keys), (fan_in, fan_out), jnp.float32,
                               -bound, bound)
        b = jax.random.uniform(next(keys), (fan_out,), jnp.float32,
                               -bound, bound)
        return w, b

    def bn(n):
        gamma = 1.0 + 0.1 * jax.random.normal(next(keys), (n,), jnp.float32)
        beta = 0.1 * jax.random.normal(next(keys), (n,), jnp.float32)
        mean = 0.1 * jax.random.normal(next(keys), (n,), jnp.float32)
        var = 0.5 + jax.random.uniform(next(keys), (n,), jnp.float32)
        return gamma, beta, mean, var

    w1, b1 = linear(in_dim, hidden_dim)
    g1, be1, m1, v1 = bn(hidden_dim)
    w2, b2 = linear(hidden_dim, hidden_dim)
    g2, be2, m2, v2 = bn(hidden_dim)
    w3, b3 = linear(hidden_dim, out_dim)
    g3, be3, m3, v3 = bn(out_dim)
    w4, b4 = linear(out_dim, binary)

    return dict(w1=w1, b1=b1, g1=g1, be1=be1, m1=m1, v1=v1,
                w2=w2, b2=b2, g2=g2, be2=be2, m2=m2, v2=v2,
                w3=w3, b3=b3, g3=g3, be3=be3, m3=m3, v3=v3,
                w4=w4, b4=b4)


def fold_params(raw):
    """Fold eval-mode BN(i) into layer i+1's weights/bias; pack for the kernel."""
    def affine(g, beta, m, v):
        s = g / jnp.sqrt(v + BN_EPS)
        return s, beta - m * s

    s1, t1 = affine(raw['g1'], raw['be1'], raw['m1'], raw['v1'])
    s2, t2 = affine(raw['g2'], raw['be2'], raw['m2'], raw['v2'])
    s3, t3 = affine(raw['g3'], raw['be3'], raw['m3'], raw['v3'])

    w1, b1 = raw['w1'], raw['b1']
    w2 = raw['w2'] * s1[:, None]
    b2 = raw['b2'] + t1 @ raw['w2']
    w3 = raw['w3'] * s2[:, None]
    b3 = raw['b3'] + t2 @ raw['w3']
    w4 = raw['w4'] * s3[:, None]                     # (out_dim, binary)
    b4 = raw['b4'] + t3 @ raw['w4']                  # (binary,)

    bias_pack = jnp.concatenate([b1, b2, b3]).reshape(1, -1).astype(jnp.float32)

    return dict(
        w1=w1.astype(jnp.bfloat16),
        w2=w2.astype(jnp.bfloat16),
        w3=w3.astype(jnp.bfloat16),
        w4r=w4.T.astype(jnp.bfloat16),               # (binary, out_dim)
        bias=bias_pack,                              # (1, 2*hid + out) f32
        b4=b4.reshape(1, 1).astype(jnp.float32),     # scalar, SMEM
    )


# --------------------------- pure-JAX f32 reference --------------------------
def mlp_decoder_ref(raw, x):
    """Exact eval-mode PyTorch-equivalent forward in float32 (no folding)."""
    def bn(z, g, beta, m, v):
        return (z - m) / jnp.sqrt(v + BN_EPS) * g + beta

    h = bn(jnp.maximum(x @ raw['w1'] + raw['b1'], 0.0),
           raw['g1'], raw['be1'], raw['m1'], raw['v1'])
    h = bn(jnp.maximum(h @ raw['w2'] + raw['b2'], 0.0),
           raw['g2'], raw['be2'], raw['m2'], raw['v2'])
    h = bn(jnp.maximum(h @ raw['w3'] + raw['b3'], 0.0),
           raw['g3'], raw['be3'], raw['m3'], raw['v3'])
    return h @ raw['w4'] + raw['b4']


# ----------------------------------- main ------------------------------------
if __name__ == "__main__":
    key = jax.random.PRNGKey(0)
    kp_key, kx = jax.random.split(key)

    raw = make_raw_params(kp_key)
    kparams = fold_params(raw)

    # Small single-block case (grid = 1).
    B = 8
    x = jax.random.normal(kx, (B, IN_DIM), jnp.float32)
    score = jax.jit(mlp_decoder)(kparams, x)
    jax.block_until_ready(score)
    assert score.shape == (B, BINARY), score.shape

    ref = mlp_decoder_ref(raw, x)
    err = float(jnp.max(jnp.abs(score - ref)))
    assert err < 5e-2, f"mismatch vs f32 reference: max_err={err}"

    # Multi-block + padded-batch path (grid = 2, Bp > B).
    B2 = 200
    x2 = jax.random.normal(jax.random.PRNGKey(1), (B2, IN_DIM), jnp.float32)
    fwd2 = jax.jit(functools.partial(mlp_decoder, block_rows=128))
    score2 = fwd2(kparams, x2)
    jax.block_until_ready(score2)
    assert score2.shape == (B2, BINARY), score2.shape

    ref2 = mlp_decoder_ref(raw, x2)
    err2 = float(jnp.max(jnp.abs(score2 - ref2)))
    assert err2 < 5e-2, f"mismatch vs f32 reference (multi-block): max_err={err2}"

    print("KERNEL_OK")
</pallas_src>

<mosaic_0001>
module attributes {stable_mosaic.version = 11 : i64} {
  func.func @_mlp_decoder_kernel(%arg0: i32, %arg1: memref<8x256xf32, #tpu.memory_space<vmem>>, %arg2: memref<256x512xbf16, #tpu.memory_space<vmem>>, %arg3: memref<512x512xbf16, #tpu.memory_space<vmem>>, %arg4: memref<512x128xbf16, #tpu.memory_space<vmem>>, %arg5: memref<1x128xbf16, #tpu.memory_space<vmem>>, %arg6: memref<1x1152xf32, #tpu.memory_space<vmem>>, %arg7: memref<1x1xf32, #tpu.memory_space<smem>>, %arg8: memref<1x8xf32, #tpu.memory_space<vmem>>) attributes {dimension_semantics = [#tpu.dimension_semantics<parallel>], iteration_bounds = array<i64: 1>, scalar_prefetch = 0 : i64, scratch_operands = 0 : i64, tpu.core_type = #tpu.core_type<tc>, window_params = [{transform_indices = @transform_0, window_bounds = array<i64: 8, 256>}, {pipeline_mode = #tpu.pipeline_mode<synchronous>, transform_indices = @transform_1, window_bounds = array<i64: 256, 512>}, {pipeline_mode = #tpu.pipeline_mode<synchronous>, transform_indices = @transform_2, window_bounds = array<i64: 512, 512>}, {pipeline_mode = #tpu.pipeline_mode<synchronous>, transform_indices = @transform_3, window_bounds = array<i64: 512, 128>}, {pipeline_mode = #tpu.pipeline_mode<synchronous>, transform_indices = @transform_4, window_bounds = array<i64: 1, 128>}, {pipeline_mode = #tpu.pipeline_mode<synchronous>, transform_indices = @transform_5, window_bounds = array<i64: 1, 1152>}, {transform_indices = @transform_6, window_bounds = array<i64: 1, 1>}, {transform_indices = @transform_7, window_bounds = array<i64: 1, 8>}]} {
    %c0 = arith.constant 0 : index
    %c0_0 = arith.constant 0 : index
    %0 = vector.load %arg6[%c0, %c0_0] : memref<1x1152xf32, #tpu.memory_space<vmem>>, vector<1x512xf32>
    %c0_1 = arith.constant 0 : index
    %c512 = arith.constant 512 : index
    %1 = vector.load %arg6[%c0_1, %c512] : memref<1x1152xf32, #tpu.memory_space<vmem>>, vector<1x512xf32>
    %c0_2 = arith.constant 0 : index
    %c1024 = arith.constant 1024 : index
    %2 = vector.load %arg6[%c0_2, %c1024] : memref<1x1152xf32, #tpu.memory_space<vmem>>, vector<1x128xf32>
    %c0_3 = arith.constant 0 : index
    %c0_4 = arith.constant 0 : index
    %3 = vector.load %arg1[%c0_3, %c0_4] : memref<8x256xf32, #tpu.memory_space<vmem>>, vector<8x256xf32>
    %4 = arith.truncf %3 : vector<8x256xf32> to vector<8x256xbf16>
    %c0_5 = arith.constant 0 : index
    %c0_6 = arith.constant 0 : index
    %5 = vector.load %arg2[%c0_5, %c0_6] : memref<256x512xbf16, #tpu.memory_space<vmem>>, vector<256x512xbf16>
    %cst = arith.constant dense<0.000000e+00> : vector<8x512xf32>
    %6 = tpu.matmul %4, %5, %cst {dimension_numbers = #tpu.dot_dimension_numbers<[1], [0], [0], [1], [0, 0, 1, 1], [], []>} : vector<8x256xbf16>, vector<256x512xbf16>, vector<8x512xf32> -> vector<8x512xf32>
    %7 = vector.broadcast %0 : vector<1x512xf32> to vector<8x512xf32>
    %8 = arith.addf %6, %7 : vector<8x512xf32>
    %cst_7 = arith.constant 0.000000e+00 : f32
    %9 = vector.broadcast %cst_7 : f32 to vector<8x512xf32>
    %10 = arith.maximumf %8, %9 : vector<8x512xf32>
    %11 = arith.truncf %10 : vector<8x512xf32> to vector<8x512xbf16>
    %c0_8 = arith.constant 0 : index
    %c0_9 = arith.constant 0 : index
    %12 = vector.load %arg3[%c0_8, %c0_9] : memref<512x512xbf16, #tpu.memory_space<vmem>>, vector<512x512xbf16>
    %cst_10 = arith.constant dense<0.000000e+00> : vector<8x512xf32>
    %13 = tpu.matmul %11, %12, %cst_10 {dimension_numbers = #tpu.dot_dimension_numbers<[1], [0], [0], [1], [0, 0, 1, 1], [], []>} : vector<8x512xbf16>, vector<512x512xbf16>, vector<8x512xf32> -> vector<8x512xf32>
    %14 = vector.broadcast %1 : vector<1x512xf32> to vector<8x512xf32>
    %15 = arith.addf %13, %14 : vector<8x512xf32>
    %cst_11 = arith.constant 0.000000e+00 : f32
    %16 = vector.broadcast %cst_11 : f32 to vector<8x512xf32>
    %17 = arith.maximumf %15, %16 : vector<8x512xf32>
    %18 = arith.truncf %17 : vector<8x512xf32> to vector<8x512xbf16>
    %c0_12 = arith.constant 0 : index
    %c0_13 = arith.constant 0 : index
    %19 = vector.load %arg4[%c0_12, %c0_13] : memref<512x128xbf16, #tpu.memory_space<vmem>>, vector<512x128xbf16>
    %cst_14 = arith.constant dense<0.000000e+00> : vector<8x128xf32>
    %20 = tpu.matmul %18, %19, %cst_14 {dimension_numbers = #tpu.dot_dimension_numbers<[1], [0], [0], [1], [0, 0, 1, 1], [], []>} : vector<8x512xbf16>, vector<512x128xbf16>, vector<8x128xf32> -> vector<8x128xf32>
    %21 = vector.broadcast %2 : vector<1x128xf32> to vector<8x128xf32>
    %22 = arith.addf %20, %21 : vector<8x128xf32>
    %cst_15 = arith.constant 0.000000e+00 : f32
    %23 = vector.broadcast %cst_15 : f32 to vector<8x128xf32>
    %24 = arith.maximumf %22, %23 : vector<8x128xf32>
    %25 = arith.truncf %24 : vector<8x128xf32> to vector<8x128xbf16>
    %c0_16 = arith.constant 0 : index
    %c0_17 = arith.constant 0 : index
    %26 = vector.load %arg5[%c0_16, %c0_17] : memref<1x128xbf16, #tpu.memory_space<vmem>>, vector<1x128xbf16>
    %cst_18 = arith.constant dense<0.000000e+00> : vector<1x8xf32>
    %27 = tpu.matmul %26, %25, %cst_18 {dimension_numbers = #tpu.dot_dimension_numbers<[1], [1], [0], [0], [0, 0, 1, 0], [], []>} : vector<1x128xbf16>, vector<8x128xbf16>, vector<1x8xf32> -> vector<1x8xf32>
    %c0_19 = arith.constant 0 : index
    %c0_20 = arith.constant 0 : index
    %28 = memref.load %arg7[%c0_19, %c0_20] : memref<1x1xf32, #tpu.memory_space<smem>>
    %29 = vector.broadcast %28 : f32 to vector<1x8xf32>
    %30 = arith.addf %27, %29 : vector<1x8xf32>
    %c0_21 = arith.constant 0 : index
    %c0_22 = arith.constant 0 : index
    %31 = vector.load %arg8[%c0_21, %c0_22] : memref<1x8xf32, #tpu.memory_space<vmem>>, vector<1x8xf32>
    tpu.vector_store %arg8[%c0_21, %c0_22], %30 {strides = array<i32>} : memref<1x8xf32, #tpu.memory_space<vmem>>, vector<1x8xf32>,
    return
  }
  func.func @transform_0(%arg0: i32) -> (i32, i32) {
    %c0_i32 = arith.constant 0 : i32
    %c0_i32_0 = arith.constant 0 : i32
    return %arg0, %c0_i32 : i32, i32
  }
  func.func @transform_1(%arg0: i32) -> (i32, i32) {
    %c0_i32 = arith.constant 0 : i32
    %c0_i32_0 = arith.constant 0 : i32
    %c0_i32_1 = arith.constant 0 : i32
    return %c0_i32, %c0_i32_0 : i32, i32
  }
  func.func @transform_2(%arg0: i32) -> (i32, i32) {
    %c0_i32 = arith.constant 0 : i32
    %c0_i32_0 = arith.constant 0 : i32
    %c0_i32_1 = arith.constant 0 : i32
    return %c0_i32, %c0_i32_0 : i32, i32
  }
  func.func @transform_3(%arg0: i32) -> (i32, i32) {
    %c0_i32 = arith.constant 0 : i32
    %c0_i32_0 = arith.constant 0 : i32
    %c0_i32_1 = arith.constant 0 : i32
    return %c0_i32, %c0_i32_0 : i32, i32
  }
  func.func @transform_4(%arg0: i32) -> (i32, i32) {
    %c0_i32 = arith.constant 0 : i32
    %c0_i32_0 = arith.constant 0 : i32
    %c0_i32_1 = arith.constant 0 : i32
    return %c0_i32, %c0_i32_0 : i32, i32
  }
  func.func @transform_5(%arg0: i32) -> (i32, i32) {
    %c0_i32 = arith.constant 0 : i32
    %c0_i32_0 = arith.constant 0 : i32
    %c0_i32_1 = arith.constant 0 : i32
    return %c0_i32, %c0_i32_0 : i32, i32
  }
  func.func @transform_6(%arg0: i32) -> (i32, i32) {
    %c0_i32 = arith.constant 0 : i32
    %c0_i32_0 = arith.constant 0 : i32
    %c0_i32_1 = arith.constant 0 : i32
    return %c0_i32, %c0_i32_0 : i32, i32
  }
  func.func @transform_7(%arg0: i32) -> (i32, i32) {
    %c0_i32 = arith.constant 0 : i32
    %c0_i32_0 = arith.constant 0 : i32
    return %c0_i32, %arg0 : i32, i32
  }
}

</mosaic_0001>

<llo_original>
// kernel: mlp_decoder.1
$region0: #{mlp_decoder.1}
  #allocation0 [shape = 'u32[]', space=smem, size = 0x4, offset = 0x4, fixed_abs, tag = 'smem constant byte address 0x4 - core index']
  #allocation1 [shape = 'u32[72,128]{1,0:T(1,128)}', space=vmem, size = 0x9000, scoped, tag = 'internal scratch']
  #allocation2 [shape = 'f32[1,1]{1,0:T(1,128)S(6)}', space=smem, size = 0x200, scoped, tag = 'scoped memory for mlp_decoder.1']
  %s0 = inlined_call_operand.hbm [shape: f32[8,256], index: 0, kind: input, shape index: {}]
  %s1 = inlined_call_operand.hbm [shape: bf16[256,512], index: 1, kind: input, shape index: {}]
  %s2 = inlined_call_operand.hbm [shape: bf16[512,512], index: 2, kind: input, shape index: {}]
  %s3 = inlined_call_operand.hbm [shape: bf16[512,128], index: 3, kind: input, shape index: {}]
  %s4 = inlined_call_operand.vmem [shape: bf16[1,128], index: 4, kind: input, shape index: {}]
  %s5 = inlined_call_operand.hbm [shape: f32[1,1152], index: 5, kind: input, shape index: {}]
  %s6 = inlined_call_operand.<no memory space> [shape: f32[1,1], index: 6, kind: input, shape index: {}]
  %s7 = inlined_call_operand.hbm [shape: f32[1,8], index: 7, kind: output, shape index: {}]
  %s8 = sld [smem:[#allocation0]]
  $region58: #{mlp_decoder.1} parent=0
    _
  %s10 = ssub.s32 1, %s8
  %s11 = scalar_select 0, %s10, %s8
  %12 = sst [smem:[#allocation2]] %s6
  $region1: #{mlp_decoder.1} parent=0
    #allocation3 [shape = 'u8[8192]{0}', space=vmem, size = 0x2000, scoped, tag = 'input window, operand 0, single buffered']
    #allocation4 [shape = 's32[1]{0}', space=sflag, size = 0x4, scoped, tag = 'scoped memory for mlp_decoder.1']
    #allocation5 [shape = 's32[1]{0}', space=sflag, size = 0x4, scoped, tag = 'scoped memory for mlp_decoder.1']
    #allocation6 [shape = 'u8[262144]{0}', space=vmem, size = 0x40000, scoped, tag = 'input window, operand 1, single buffered']
    #allocation7 [shape = 's32[1]{0}', space=sflag, size = 0x4, scoped, tag = 'scoped memory for mlp_decoder.1']
    #allocation8 [shape = 'u8[524288]{0}', space=vmem, size = 0x80000, scoped, tag = 'input window, operand 2, single buffered']
    #allocation9 [shape = 'u8[131072]{0}', space=vmem, size = 0x20000, scoped, tag = 'input window, operand 3, single buffered']
    #allocation10 [shape = 's32[1]{0}', space=sflag, size = 0x4, scoped, tag = 'scoped memory for mlp_decoder.1']
    #allocation11 [shape = 'u8[4608]{0}', space=vmem, size = 0x1400, scoped, tag = 'input window, operand 5, single buffered']
    #allocation12 [shape = 'u8[512]{0}', space=vmem, size = 0x400, scoped, tag = 'output window, operand 0, single buffered']
    %13 = vsyncpa [#allocation4], 0
    %14 = vsyncpa [#allocation7], 0
    %15 = vsyncpa [#allocation10], 0
    %16 = vsyncpa [#allocation5], 0
    // Predicated region
    $region2: #{mlp_decoder.1} parent=1 // pred_check
      _
    $region3: #{mlp_decoder.1} parent=1 // pred_check_branch
      %18 = sbr.rel (0) target = $region5
    $region4: #{mlp_decoder.1} parent=1 // pred_region
      %20 = vsyncadd [#allocation4], 0
      %s22 = sshll.u32 %s0, 4
      %s23 = int_to_ptr.hbm [resolvable:$true] %s22
      %s24 = sshll.u32 [#allocation3], 4
      %s25 = int_to_ptr.vmem [resolvable:$true] %s24
      %27 = dma.hbm_to_vmem [thread:$0]  %s23, 256, %s25, [#allocation4]
    $region5: #{mlp_decoder.1} parent=1 // pred_fallthru
      _
    // Predicated region
    $region6: #{mlp_decoder.1} parent=1 // pred_check
      _
    $region7: #{mlp_decoder.1} parent=1 // pred_check_branch
      %29 = sbr.rel (0) target = $region9
    $region8: #{mlp_decoder.1} parent=1 // pred_region
      %31 = vsyncadd [#allocation7], 0
      %s32 = sshll.u32 %s1, 4
      %s33 = int_to_ptr.hbm [resolvable:$true] %s32
      %s34 = sshll.u32 [#allocation6], 4
      %s35 = int_to_ptr.vmem [resolvable:$true] %s34
      %40 = dma.hbm_to_vmem [thread:$0]  %s33, 8192, %s35, [#allocation7], 256, 256, 16
    $region9: #{mlp_decoder.1} parent=1 // pred_fallthru
      _
    // Predicated region
    $region10: #{mlp_decoder.1} parent=1 // pred_check
      _
    $region11: #{mlp_decoder.1} parent=1 // pred_check_branch
      %42 = sbr.rel (0) target = $region13
    $region12: #{mlp_decoder.1} parent=1 // pred_region
      %44 = vsyncadd [#allocation7], 0
      %s45 = sshll.u32 %s2, 4
      %s46 = int_to_ptr.hbm [resolvable:$true] %s45
      %s47 = sshll.u32 [#allocation8], 4
      %s48 = int_to_ptr.vmem [resolvable:$true] %s47
      %53 = dma.hbm_to_vmem [thread:$0]  %s46, 16384, %s48, [#allocation7], 256, 256, 16
    $region13: #{mlp_decoder.1} parent=1 // pred_fallthru
      _
    // Predicated region
    $region14: #{mlp_decoder.1} parent=1 // pred_check
      _
    $region15: #{mlp_decoder.1} parent=1 // pred_check_branch
      %55 = sbr.rel (0) target = $region17
    $region16: #{mlp_decoder.1} parent=1 // pred_region
      %57 = vsyncadd [#allocation10], 0
      %s58 = sshll.u32 %s3, 4
      %s59 = int_to_ptr.hbm [resolvable:$true] %s58
      %s60 = sshll.u32 [#allocation9], 4
      %s61 = int_to_ptr.vmem [resolvable:$true] %s60
      %66 = dma.hbm_to_vmem [thread:$0]  %s59, 4096, %s61, [#allocation10], 64, 64, 4
    $region17: #{mlp_decoder.1} parent=1 // pred_fallthru
      _
    // Predicated region
    $region18: #{mlp_decoder.1} parent=1 // pred_check
      _
    $region19: #{mlp_decoder.1} parent=1 // pred_check_branch
      %68 = sbr.rel (0) target = $region21
    $region20: #{mlp_decoder.1} parent=1 // pred_region
      _
    $region21: #{mlp_decoder.1} parent=1 // pred_fallthru
      _
    // Predicated region
    $region22: #{mlp_decoder.1} parent=1 // pred_check
      _
    $region23: #{mlp_decoder.1} parent=1 // pred_check_branch
      %70 = sbr.rel (0) target = $region25
    $region24: #{mlp_decoder.1} parent=1 // pred_region
      %72 = vsyncadd [#allocation10], 0
      %s74 = sshll.u32 %s5, 4
      %s75 = int_to_ptr.hbm [resolvable:$true] %s74
      %s76 = sshll.u32 [#allocation11], 4
      %s77 = int_to_ptr.vmem [resolvable:$true] %s76
      %79 = dma.hbm_to_vmem [thread:$0]  %s75, 144, %s77, [#allocation10]
    $region25: #{mlp_decoder.1} parent=1 // pred_fallthru
      _
    // Predicated region
    $region26: #{mlp_decoder.1} parent=1 // pred_check
      _
    $region27: #{mlp_decoder.1} parent=1 // pred_check_branch
      %81 = sbr.rel (0) target = $region29
    $region28: #{mlp_decoder.1} parent=1 // pred_region
      _
    $region29: #{mlp_decoder.1} parent=1 // pred_fallthru
      _
    // Predicated region
    $region30: #{mlp_decoder.1} parent=1 // pred_check
      _
    $region31: #{mlp_decoder.1} parent=1 // pred_check_branch
      %83 = sbr.rel (0) target = $region33
    $region32: #{mlp_decoder.1} parent=1 // pred_region
      %85 = dma.done [#allocation4], 256
    $region33: #{mlp_decoder.1} parent=1 // pred_fallthru
      _
    // Predicated region
    $region34: #{mlp_decoder.1} parent=1 // pred_check
      _
    $region35: #{mlp_decoder.1} parent=1 // pred_check_branch
      %87 = sbr.rel (0) target = $region37
    $region36: #{mlp_decoder.1} parent=1 // pred_region
      %89 = dma.done [#allocation7], 8192
    $region37: #{mlp_decoder.1} parent=1 // pred_fallthru
      _
    // Predicated region
    $region38: #{mlp_decoder.1} parent=1 // pred_check
      _
    $region39: #{mlp_decoder.1} parent=1 // pred_check_branch
      %91 = sbr.rel (0) target = $region41
    $region40: #{mlp_decoder.1} parent=1 // pred_region
      %93 = dma.done [#allocation7], 16384
    $region41: #{mlp_decoder.1} parent=1 // pred_fallthru
      _
    // Predicated region
    $region42: #{mlp_decoder.1} parent=1 // pred_check
      _
    $region43: #{mlp_decoder.1} parent=1 // pred_check_branch
      %95 = sbr.rel (0) target = $region45
    $region44: #{mlp_decoder.1} parent=1 // pred_region
      %97 = dma.done [#allocation10], 4096
    $region45: #{mlp_decoder.1} parent=1 // pred_fallthru
      _
    // Predicated region
    $region46: #{mlp_decoder.1} parent=1 // pred_check
      _
    $region47: #{mlp_decoder.1} parent=1 // pred_check_branch
      %99 = sbr.rel (0) target = $region49
    $region48: #{mlp_decoder.1} parent=1 // pred_region
      %101 = dma.done [#allocation10], 144
    $region49: #{mlp_decoder.1} parent=1 // pred_fallthru
      _
    %v103 = vld [vmem:[#allocation11] sm:$0xf]
    %v104 = vld [vmem:[#allocation11 + $0x4] sm:$0xf]
    %v105 = vld [vmem:[#allocation11 + $0x8] sm:$0x1]
    %v106 = vld [vmem:[#allocation3] sm:$0xff]
    %v107 = vld [vmem:[#allocation3 + $0x8] sm:$0xff]
    %v108 = vpack.c.bf16 %v106, %v106
    %v109 = vpack.c.bf16 %v107, %v107
    %v110 = vld [vmem:[#allocation6] sm:$0xff]
    %v111 = vld [vmem:[#allocation6 + $0x8] sm:$0xff]
    %v112 = vld [vmem:[#allocation6 + $0x10] sm:$0xff]
    %v113 = vld [vmem:[#allocation6 + $0x18] sm:$0xff]
    %v114 = vld [vmem:[#allocation6 + $0x20] sm:$0xff]
    %v115 = vld [vmem:[#allocation6 + $0x28] sm:$0xff]
    %v116 = vld [vmem:[#allocation6 + $0x30] sm:$0xff]
    %v117 = vld [vmem:[#allocation6 + $0x38] sm:$0xff]
    %v118 = vld [vmem:[#allocation6 + $0x40] sm:$0xff]
    %v119 = vld [vmem:[#allocation6 + $0x48] sm:$0xff]
    %v120 = vld [vmem:[#allocation6 + $0x50] sm:$0xff]
    %v121 = vld [vmem:[#allocation6 + $0x58] sm:$0xff]
    %v122 = vld [vmem:[#allocation6 + $0x60] sm:$0xff]
    %v123 = vld [vmem:[#allocation6 + $0x68] sm:$0xff]
    %v124 = vld [vmem:[#allocation6 + $0x70] sm:$0xff]
    %v125 = vld [vmem:[#allocation6 + $0x78] sm:$0xff]
    %v126 = vld [vmem:[#allocation6 + $0x80] sm:$0xff]
    %v127 = vld [vmem:[#allocation6 + $0x88] sm:$0xff]
    %v128 = vld [vmem:[#allocation6 + $0x90] sm:$0xff]
    %v129 = vld [vmem:[#allocation6 + $0x98] sm:$0xff]
    %v130 = vld [vmem:[#allocation6 + $0xa0] sm:$0xff]
    %v131 = vld [vmem:[#allocation6 + $0xa8] sm:$0xff]
    %v132 = vld [vmem:[#allocation6 + $0xb0] sm:$0xff]
    %v133 = vld [vmem:[#allocation6 + $0xb8] sm:$0xff]
    %v134 = vld [vmem:[#allocation6 + $0xc0] sm:$0xff]
    %v135 = vld [vmem:[#allocation6 + $0xc8] sm:$0xff]
    %v136 = vld [vmem:[#allocation6 + $0xd0] sm:$0xff]
    %v137 = vld [vmem:[#allocation6 + $0xd8] sm:$0xff]
    %v138 = vld [vmem:[#allocation6 + $0xe0] sm:$0xff]
    %v139 = vld [vmem:[#allocation6 + $0xe8] sm:$0xff]
    %v140 = vld [vmem:[#allocation6 + $0xf0] sm:$0xff]
    %v141 = vld [vmem:[#allocation6 + $0xf8] sm:$0xff]
    %v142 = vld [vmem:[#allocation6 + $0x100] sm:$0xff]
    %v143 = vld [vmem:[#allocation6 + $0x108] sm:$0xff]
    %v144 = vld [vmem:[#allocation6 + $0x110] sm:$0xff]
    %v145 = vld [vmem:[#allocation6 + $0x118] sm:$0xff]
    %v146 = vld [vmem:[#allocation6 + $0x120] sm:$0xff]
    %v147 = vld [vmem:[#allocation6 + $0x128] sm:$0xff]
    %v148 = vld [vmem:[#allocation6 + $0x130] sm:$0xff]
    %v149 = vld [vmem:[#allocation6 + $0x138] sm:$0xff]
    %v150 = vld [vmem:[#allocation6 + $0x140] sm:$0xff]
    %v151 = vld [vmem:[#allocation6 + $0x148] sm:$0xff]
    %v152 = vld [vmem:[#allocation6 + $0x150] sm:$0xff]
    %v153 = vld [vmem:[#allocation6 + $0x158] sm:$0xff]
    %v154 = vld [vmem:[#allocation6 + $0x160] sm:$0xff]
    %v155 = vld [vmem:[#allocation6 + $0x168] sm:$0xff]
    %v156 = vld [vmem:[#allocation6 + $0x170] sm:$0xff]
    %v157 = vld [vmem:[#allocation6 + $0x178] sm:$0xff]
    %v158 = vld [vmem:[#allocation6 + $0x180] sm:$0xff]
    %v159 = vld [vmem:[#allocation6 + $0x188] sm:$0xff]
    %v160 = vld [vmem:[#allocation6 + $0x190] sm:$0xff]
    %v161 = vld [vmem:[#allocation6 + $0x198] sm:$0xff]
    %v162 = vld [vmem:[#allocation6 + $0x1a0] sm:$0xff]
    %v163 = vld [vmem:[#allocation6 + $0x1a8] sm:$0xff]
    %v164 = vld [vmem:[#allocation6 + $0x1b0] sm:$0xff]
    %v165 = vld [vmem:[#allocation6 + $0x1b8] sm:$0xff]
    %v166 = vld [vmem:[#allocation6 + $0x1c0] sm:$0xff]
    %v167 = vld [vmem:[#allocation6 + $0x1c8] sm:$0xff]
    %v168 = vld [vmem:[#allocation6 + $0x1d0] sm:$0xff]
    %v169 = vld [vmem:[#allocation6 + $0x1d8] sm:$0xff]
    %v170 = vld [vmem:[#allocation6 + $0x1e0] sm:$0xff]
    %v171 = vld [vmem:[#allocation6 + $0x1e8] sm:$0xff]
    %v172 = vld [vmem:[#allocation6 + $0x1f0] sm:$0xff]
    %v173 = vld [vmem:[#allocation6 + $0x1f8] sm:$0xff]
    %v175 = vperm.slane %v103, 0
    %v176 = vperm.slane %v103, 1
    %v177 = vperm.slane %v103, 2
    %v178 = vperm.slane %v103, 3
    %v247 = vunpack.c.l.b16 %v110
    %v248 = vunpack.c.h.b16 %v110
    %v249 = vunpack.c.l.b16 %v111
    %v250 = vunpack.c.h.b16 %v111
    %v251 = vunpack.c.l.b16 %v112
    %v252 = vunpack.c.h.b16 %v112
    %v253 = vunpack.c.l.b16 %v113
    %v254 = vunpack.c.h.b16 %v113
    %v255 = vunpack.c.l.b16 %v114
    %v256 = vunpack.c.h.b16 %v114
    %v257 = vunpack.c.l.b16 %v115
    %v258 = vunpack.c.h.b16 %v115
    %v259 = vunpack.c.l.b16 %v116
    %v260 = vunpack.c.h.b16 %v116
    %v261 = vunpack.c.l.b16 %v117
    %v262 = vunpack.c.h.b16 %v117
    %v263 = vunpack.c.l.b16 %v118
    %v264 = vunpack.c.h.b16 %v118
    %v265 = vunpack.c.l.b16 %v119
    %v266 = vunpack.c.h.b16 %v119
    %v267 = vunpack.c.l.b16 %v120
    %v268 = vunpack.c.h.b16 %v120
    %v269 = vunpack.c.l.b16 %v121
    %v270 = vunpack.c.h.b16 %v121
    %v271 = vunpack.c.l.b16 %v122
    %v272 = vunpack.c.h.b16 %v122
    %v273 = vunpack.c.l.b16 %v123
    %v274 = vunpack.c.h.b16 %v123
    %v275 = vunpack.c.l.b16 %v124
    %v276 = vunpack.c.h.b16 %v124
    %v277 = vunpack.c.l.b16 %v125
    %v278 = vunpack.c.h.b16 %v125
    %v279 = vunpack.c.l.b16 %v126
    %v280 = vunpack.c.h.b16 %v126
    %v281 = vunpack.c.l.b16 %v127
    %v282 = vunpack.c.h.b16 %v127
    %v283 = vunpack.c.l.b16 %v128
    %v284 = vunpack.c.h.b16 %v128
    %v285 = vunpack.c.l.b16 %v129
    %v286 = vunpack.c.h.b16 %v129
    %v287 = vunpack.c.l.b16 %v130
    %v288 = vunpack.c.h.b16 %v130
    %v289 = vunpack.c.l.b16 %v131
    %v290 = vunpack.c.h.b16 %v131
    %v291 = vunpack.c.l.b16 %v132
    %v292 = vunpack.c.h.b16 %v132
    %v293 = vunpack.c.l.b16 %v133
    %v294 = vunpack.c.h.b16 %v133
    %v295 = vunpack.c.l.b16 %v134
    %v296 = vunpack.c.h.b16 %v134
    %v297 = vunpack.c.l.b16 %v135
    %v298 = vunpack.c.h.b16 %v135
    %v299 = vunpack.c.l.b16 %v136
    %v300 = vunpack.c.h.b16 %v136
    %v301 = vunpack.c.l.b16 %v137
    %v302 = vunpack.c.h.b16 %v137
    %v303 = vunpack.c.l.b16 %v138
    %v304 = vunpack.c.h.b16 %v138
    %v305 = vunpack.c.l.b16 %v139
    %v306 = vunpack.c.h.b16 %v139
    %v307 = vunpack.c.l.b16 %v140
    %v308 = vunpack.c.h.b16 %v140
    %v309 = vunpack.c.l.b16 %v141
    %v310 = vunpack.c.h.b16 %v141
    %v311 = vunpack.c.l.b16 %v142
    %v312 = vunpack.c.h.b16 %v142
    %v313 = vunpack.c.l.b16 %v143
    %v314 = vunpack.c.h.b16 %v143
    %v315 = vunpack.c.l.b16 %v144
    %v316 = vunpack.c.h.b16 %v144
    %v317 = vunpack.c.l.b16 %v145
    %v318 = vunpack.c.h.b16 %v145
    %v319 = vunpack.c.l.b16 %v146
    %v320 = vunpack.c.h.b16 %v146
    %v321 = vunpack.c.l.b16 %v147
    %v322 = vunpack.c.h.b16 %v147
    %v323 = vunpack.c.l.b16 %v148
    %v324 = vunpack.c.h.b16 %v148
    %v325 = vunpack.c.l.b16 %v149
    %v326 = vunpack.c.h.b16 %v149
    %v327 = vunpack.c.l.b16 %v150
    %v328 = vunpack.c.h.b16 %v150
    %v329 = vunpack.c.l.b16 %v151
    %v330 = vunpack.c.h.b16 %v151
    %v331 = vunpack.c.l.b16 %v152
    %v332 = vunpack.c.h.b16 %v152
    %v333 = vunpack.c.l.b16 %v153
    %v334 = vunpack.c.h.b16 %v153
    %v335 = vunpack.c.l.b16 %v154
    %v336 = vunpack.c.h.b16 %v154
    %v337 = vunpack.c.l.b16 %v155
    %v338 = vunpack.c.h.b16 %v155
    %v339 = vunpack.c.l.b16 %v156
    %v340 = vunpack.c.h.b16 %v156
    %v341 = vunpack.c.l.b16 %v157
    %v342 = vunpack.c.h.b16 %v157
    %v343 = vunpack.c.l.b16 %v158
    %v344 = vunpack.c.h.b16 %v158
    %v345 = vunpack.c.l.b16 %v159
    %v346 = vunpack.c.h.b16 %v159
    %v347 = vunpack.c.l.b16 %v160
    %v348 = vunpack.c.h.b16 %v160
    %v349 = vunpack.c.l.b16 %v161
    %v350 = vunpack.c.h.b16 %v161
    %v351 = vunpack.c.l.b16 %v162
    %v352 = vunpack.c.h.b16 %v162
    %v353 = vunpack.c.l.b16 %v163
    %v354 = vunpack.c.h.b16 %v163
    %v355 = vunpack.c.l.b16 %v164
    %v356 = vunpack.c.h.b16 %v164
    %v357 = vunpack.c.l.b16 %v165
    %v358 = vunpack.c.h.b16 %v165
    %v359 = vunpack.c.l.b16 %v166
    %v360 = vunpack.c.h.b16 %v166
    %v361 = vunpack.c.l.b16 %v167
    %v362 = vunpack.c.h.b16 %v167
    %v363 = vunpack.c.l.b16 %v168
    %v364 = vunpack.c.h.b16 %v168
    %v365 = vunpack.c.l.b16 %v169
    %v366 = vunpack.c.h.b16 %v169
    %v367 = vunpack.c.l.b16 %v170
    %v368 = vunpack.c.h.b16 %v170
    %v369 = vunpack.c.l.b16 %v171
    %v370 = vunpack.c.h.b16 %v171
    %v371 = vunpack.c.l.b16 %v172
    %v372 = vunpack.c.h.b16 %v172
    %v373 = vunpack.c.l.b16 %v173
    %v374 = vunpack.c.h.b16 %v173
    %v375 = vpack.c.b16 %v251, %v247
    %v376 = vpack.c.b16 %v252, %v248
    %v377 = vpack.c.b16 %v253, %v249
    %v378 = vpack.c.b16 %v254, %v250
    %v379 = vpack.c.b16 %v259, %v255
    %v380 = vpack.c.b16 %v260, %v256
    %v381 = vpack.c.b16 %v261, %v257
    %v382 = vpack.c.b16 %v262, %v258
    %v383 = vpack.c.b16 %v267, %v263
    %v384 = vpack.c.b16 %v268, %v264
    %v385 = vpack.c.b16 %v269, %v265
    %v386 = vpack.c.b16 %v270, %v266
    %v387 = vpack.c.b16 %v275, %v271
    %v388 = vpack.c.b16 %v276, %v272
    %v389 = vpack.c.b16 %v277, %v273
    %v390 = vpack.c.b16 %v278, %v274
    %v391 = vpack.c.b16 %v283, %v279
    %v392 = vpack.c.b16 %v284, %v280
    %v393 = vpack.c.b16 %v285, %v281
    %v394 = vpack.c.b16 %v286, %v282
    %v395 = vpack.c.b16 %v291, %v287
    %v396 = vpack.c.b16 %v292, %v288
    %v397 = vpack.c.b16 %v293, %v289
    %v398 = vpack.c.b16 %v294, %v290
    %v399 = vpack.c.b16 %v299, %v295
    %v400 = vpack.c.b16 %v300, %v296
    %v401 = vpack.c.b16 %v301, %v297
    %v402 = vpack.c.b16 %v302, %v298
    %v403 = vpack.c.b16 %v307, %v303
    %v404 = vpack.c.b16 %v308, %v304
    %v405 = vpack.c.b16 %v309, %v305
    %v406 = vpack.c.b16 %v310, %v306
    %v407 = vpack.c.b16 %v315, %v311
    %v408 = vpack.c.b16 %v316, %v312
    %v409 = vpack.c.b16 %v317, %v313
    %v410 = vpack.c.b16 %v318, %v314
    %v411 = vpack.c.b16 %v323, %v319
    %v412 = vpack.c.b16 %v324, %v320
    %v413 = vpack.c.b16 %v325, %v321
    %v414 = vpack.c.b16 %v326, %v322
    %v415 = vpack.c.b16 %v331, %v327
    %v416 = vpack.c.b16 %v332, %v328
    %v417 = vpack.c.b16 %v333, %v329
    %v418 = vpack.c.b16 %v334, %v330
    %v419 = vpack.c.b16 %v339, %v335
    %v420 = vpack.c.b16 %v340, %v336
    %v421 = vpack.c.b16 %v341, %v337
    %v422 = vpack.c.b16 %v342, %v338
    %v423 = vpack.c.b16 %v347, %v343
    %v424 = vpack.c.b16 %v348, %v344
    %v425 = vpack.c.b16 %v349, %v345
    %v426 = vpack.c.b16 %v350, %v346
    %v427 = vpack.c.b16 %v355, %v351
    %v428 = vpack.c.b16 %v356, %v352
    %v429 = vpack.c.b16 %v357, %v353
    %v430 = vpack.c.b16 %v358, %v354
    %v431 = vpack.c.b16 %v363, %v359
    %v432 = vpack.c.b16 %v364, %v360
    %v433 = vpack.c.b16 %v365, %v361
    %v434 = vpack.c.b16 %v366, %v362
    %v435 = vpack.c.b16 %v371, %v367
    %v436 = vpack.c.b16 %v372, %v368
    %v437 = vpack.c.b16 %v373, %v369
    %v438 = vpack.c.b16 %v374, %v370
    %503 = vmatpush.bf16.msra.mxu0 %v403
    %504 = vmatpush.bf16.msra.mxu0 %v399
    %505 = vmatpush.bf16.msra.mxu0 %v395
    %506 = vmatpush.bf16.msra.mxu0 %v391
    %507 = vmatpush.bf16.msra.mxu0 %v387
    %508 = vmatpush.bf16.msra.mxu0 %v383
    %509 = vmatpush.bf16.msra.mxu0 %v379
    %510 = vmatpush.bf16.msra.mxu0 %v375
    %511 = vmatmul.bf16.gmra.mxu0 %v108
    %v512 = vpop.f32.mrf.mxu0
    %v513 = vadd.f32 %v175, %v512
    %v514 = vpop.f32.mrf.mxu0
    %515 = vdwg.mxu0
    %516 = vmatpush.bf16.msra.mxu0 %v435
    %517 = vmatpush.bf16.msra.mxu0 %v431
    %518 = vmatpush.bf16.msra.mxu0 %v427
    %519 = vmatpush.bf16.msra.mxu0 %v423
    %520 = vmatpush.bf16.msra.mxu0 %v419
    %521 = vmatpush.bf16.msra.mxu0 %v415
    %522 = vmatpush.bf16.msra.mxu0 %v411
    %523 = vmatpush.bf16.msra.mxu0 %v407
    %524 = vmatmul.bf16.gmra.mxu0 %v109
    %v525 = vpop.f32.mrf.mxu0
    %v526 = vadd.f32 %v513, %v525
    %v527 = vpop.f32.mrf.mxu0
    %528 = vdwg.mxu0
    %529 = vmatpush.bf16.msra.mxu0 %v404
    %530 = vmatpush.bf16.msra.mxu0 %v400
    %531 = vmatpush.bf16.msra.mxu0 %v396
    %532 = vmatpush.bf16.msra.mxu0 %v392
    %533 = vmatpush.bf16.msra.mxu0 %v388
    %534 = vmatpush.bf16.msra.mxu0 %v384
    %535 = vmatpush.bf16.msra.mxu0 %v380
    %536 = vmatpush.bf16.msra.mxu0 %v376
    %537 = vmatmul.bf16.gmra.mxu0 %v108
    %v538 = vpop.f32.mrf.mxu0
    %v539 = vadd.f32 %v176, %v538
    %v540 = vpop.f32.mrf.mxu0
    %541 = vdwg.mxu0
    %542 = vmatpush.bf16.msra.mxu0 %v436
    %543 = vmatpush.bf16.msra.mxu0 %v432
    %544 = vmatpush.bf16.msra.mxu0 %v428
    %545 = vmatpush.bf16.msra.mxu0 %v424
    %546 = vmatpush.bf16.msra.mxu0 %v420
    %547 = vmatpush.bf16.msra.mxu0 %v416
    %548 = vmatpush.bf16.msra.mxu0 %v412
    %549 = vmatpush.bf16.msra.mxu0 %v408
    %550 = vmatmul.bf16.gmra.mxu0 %v109
    %v551 = vpop.f32.mrf.mxu0
    %v552 = vadd.f32 %v539, %v551
    %v553 = vpop.f32.mrf.mxu0
    %554 = vdwg.mxu0
    %555 = vmatpush.bf16.msra.mxu0 %v405
    %556 = vmatpush.bf16.msra.mxu0 %v401
    %557 = vmatpush.bf16.msra.mxu0 %v397
    %558 = vmatpush.bf16.msra.mxu0 %v393
    %559 = vmatpush.bf16.msra.mxu0 %v389
    %560 = vmatpush.bf16.msra.mxu0 %v385
    %561 = vmatpush.bf16.msra.mxu0 %v381
    %562 = vmatpush.bf16.msra.mxu0 %v377
    %563 = vmatmul.bf16.gmra.mxu0 %v108
    %v564 = vpop.f32.mrf.mxu0
    %v565 = vadd.f32 %v177, %v564
    %v566 = vpop.f32.mrf.mxu0
    %567 = vdwg.mxu0
    %568 = vmatpush.bf16.msra.mxu0 %v437
    %569 = vmatpush.bf16.msra.mxu0 %v433
    %570 = vmatpush.bf16.msra.mxu0 %v429
    %571 = vmatpush.bf16.msra.mxu0 %v425
    %572 = vmatpush.bf16.msra.mxu0 %v421
    %573 = vmatpush.bf16.msra.mxu0 %v417
    %574 = vmatpush.bf16.msra.mxu0 %v413
    %575 = vmatpush.bf16.msra.mxu0 %v409
    %576 = vmatmul.bf16.gmra.mxu0 %v109
    %v577 = vpop.f32.mrf.mxu0
    %v578 = vadd.f32 %v565, %v577
    %v579 = vpop.f32.mrf.mxu0
    %580 = vdwg.mxu0
    %581 = vmatpush.bf16.msra.mxu0 %v406
    %582 = vmatpush.bf16.msra.mxu0 %v402
    %583 = vmatpush.bf16.msra.mxu0 %v398
    %584 = vmatpush.bf16.msra.mxu0 %v394
    %585 = vmatpush.bf16.msra.mxu0 %v390
    %586 = vmatpush.bf16.msra.mxu0 %v386
    %587 = vmatpush.bf16.msra.mxu0 %v382
    %588 = vmatpush.bf16.msra.mxu0 %v378
    %589 = vmatmul.bf16.gmra.mxu0 %v108
    %v590 = vpop.f32.mrf.mxu0
    %v591 = vadd.f32 %v178, %v590
    %v592 = vpop.f32.mrf.mxu0
    %593 = vdwg.mxu0
    %594 = vmatpush.bf16.msra.mxu0 %v438
    %595 = vmatpush.bf16.msra.mxu0 %v434
    %596 = vmatpush.bf16.msra.mxu0 %v430
    %597 = vmatpush.bf16.msra.mxu0 %v426
    %598 = vmatpush.bf16.msra.mxu0 %v422
    %599 = vmatpush.bf16.msra.mxu0 %v418
    %600 = vmatpush.bf16.msra.mxu0 %v414
    %601 = vmatpush.bf16.msra.mxu0 %v410
    %602 = vmatmul.bf16.gmra.mxu0 %v109
    %v603 = vpop.f32.mrf.mxu0
    %v604 = vadd.f32 %v591, %v603
    %v605 = vpop.f32.mrf.mxu0
    %606 = vdwg.mxu0
    %v607 = vmax.f32 %v526, 0.0
    %v608 = vmax.f32 %v552, 0.0
    %v609 = vmax.f32 %v578, 0.0
    %v610 = vmax.f32 %v604, 0.0
    %v611 = vpack.c.bf16 %v607, %v607
    %v612 = vpack.c.bf16 %v608, %v608
    %v613 = vpack.c.bf16 %v609, %v609
    %v614 = vpack.c.bf16 %v610, %v610
    %v615 = vld [vmem:[#allocation8] sm:$0xff]
    %v616 = vld [vmem:[#allocation8 + $0x8] sm:$0xff]
    %v617 = vld [vmem:[#allocation8 + $0x10] sm:$0xff]
    %v618 = vld [vmem:[#allocation8 + $0x18] sm:$0xff]
    %v619 = vld [vmem:[#allocation8 + $0x20] sm:$0xff]
    %v620 = vld [vmem:[#allocation8 + $0x28] sm:$0xff]
    %v621 = vld [vmem:[#allocation8 + $0x30] sm:$0xff]
    %v622 = vld [vmem:[#allocation8 + $0x38] sm:$0xff]
    %v623 = vld [vmem:[#allocation8 + $0x40] sm:$0xff]
    %v624 = vld [vmem:[#allocation8 + $0x48] sm:$0xff]
    %v625 = vld [vmem:[#allocation8 + $0x50] sm:$0xff]
    %v626 = vld [vmem:[#allocation8 + $0x58] sm:$0xff]
    %v627 = vld [vmem:[#allocation8 + $0x60] sm:$0xff]
    %v628 = vld [vmem:[#allocation8 + $0x68] sm:$0xff]
    %v629 = vld [vmem:[#allocation8 + $0x70] sm:$0xff]
    %v630 = vld [vmem:[#allocation8 + $0x78] sm:$0xff]
    %v631 = vld [vmem:[#allocation8 + $0x80] sm:$0xff]
    %v632 = vld [vmem:[#allocation8 + $0x88] sm:$0xff]
    %v633 = vld [vmem:[#allocation8 + $0x90] sm:$0xff]
    %v634 = vld [vmem:[#allocation8 + $0x98] sm:$0xff]
    %v635 = vld [vmem:[#allocation8 + $0xa0] sm:$0xff]
    %v636 = vld [vmem:[#allocation8 + $0xa8] sm:$0xff]
    %v637 = vld [vmem:[#allocation8 + $0xb0] sm:$0xff]
    %v638 = vld [vmem:[#allocation8 + $0xb8] sm:$0xff]
    %v639 = vld [vmem:[#allocation8 + $0xc0] sm:$0xff]
    %v640 = vld [vmem:[#allocation8 + $0xc8] sm:$0xff]
    %v641 = vld [vmem:[#allocation8 + $0xd0] sm:$0xff]
    %v642 = vld [vmem:[#allocation8 + $0xd8] sm:$0xff]
    %v643 = vld [vmem:[#allocation8 + $0xe0] sm:$0xff]
    %v644 = vld [vmem:[#allocation8 + $0xe8] sm:$0xff]
    %v645 = vld [vmem:[#allocation8 + $0xf0] sm:$0xff]
    %v646 = vld [vmem:[#allocation8 + $0xf8] sm:$0xff]
    %v647 = vld [vmem:[#allocation8 + $0x100] sm:$0xff]
    %v648 = vld [vmem:[#allocation8 + $0x108] sm:$0xff]
    %v649 = vld [vmem:[#allocation8 + $0x110] sm:$0xff]
    %v650 = vld [vmem:[#allocation8 + $0x118] sm:$0xff]
    %v651 = vld [vmem:[#allocation8 + $0x120] sm:$0xff]
    %v652 = vld [vmem:[#allocation8 + $0x128] sm:$0xff]
    %v653 = vld [vmem:[#allocation8 + $0x130] sm:$0xff]
    %v654 = vld [vmem:[#allocation8 + $0x138] sm:$0xff]
    %v655 = vld [vmem:[#allocation8 + $0x140] sm:$0xff]
    %v656 = vld [vmem:[#allocation8 + $0x148] sm:$0xff]
    %v657 = vld [vmem:[#allocation8 + $0x150] sm:$0xff]
    %v658 = vld [vmem:[#allocation8 + $0x158] sm:$0xff]
    %v659 = vld [vmem:[#allocation8 + $0x160] sm:$0xff]
    %v660 = vld [vmem:[#allocation8 + $0x168] sm:$0xff]
    %v661 = vld [vmem:[#allocation8 + $0x170] sm:$0xff]
    %v662 = vld [vmem:[#allocation8 + $0x178] sm:$0xff]
    %v663 = vld [vmem:[#allocation8 + $0x180] sm:$0xff]
    %v664 = vld [vmem:[#allocation8 + $0x188] sm:$0xff]
    %v665 = vld [vmem:[#allocation8 + $0x190] sm:$0xff]
    %v666 = vld [vmem:[#allocation8 + $0x198] sm:$0xff]
    %v667 = vld [vmem:[#allocation8 + $0x1a0] sm:$0xff]
    %v668 = vld [vmem:[#allocation8 + $0x1a8] sm:$0xff]
    %v669 = vld [vmem:[#allocation8 + $0x1b0] sm:$0xff]
    %v670 = vld [vmem:[#allocation8 + $0x1b8] sm:$0xff]
    %v671 = vld [vmem:[#allocation8 + $0x1c0] sm:$0xff]
    %v672 = vld [vmem:[#allocation8 + $0x1c8] sm:$0xff]
    %v673 = vld [vmem:[#allocation8 + $0x1d0] sm:$0xff]
    %v674 = vld [vmem:[#allocation8 + $0x1d8] sm:$0xff]
    %v675 = vld [vmem:[#allocation8 + $0x1e0] sm:$0xff]
    %v676 = vld [vmem:[#allocation8 + $0x1e8] sm:$0xff]
    %v677 = vld [vmem:[#allocation8 + $0x1f0] sm:$0xff]
    %v678 = vld [vmem:[#allocation8 + $0x1f8] sm:$0xff]
    %v679 = vld [vmem:[#allocation8 + $0x200] sm:$0xff]
    %v680 = vld [vmem:[#allocation8 + $0x208] sm:$0xff]
    %v681 = vld [vmem:[#allocation8 + $0x210] sm:$0xff]
    %v682 = vld [vmem:[#allocation8 + $0x218] sm:$0xff]
    %v683 = vld [vmem:[#allocation8 + $0x220] sm:$0xff]
    %v684 = vld [vmem:[#allocation8 + $0x228] sm:$0xff]
    %v685 = vld [vmem:[#allocation8 + $0x230] sm:$0xff]
    %v686 = vld [vmem:[#allocation8 + $0x238] sm:$0xff]
    %v687 = vld [vmem:[#allocation8 + $0x240] sm:$0xff]
    %v688 = vld [vmem:[#allocation8 + $0x248] sm:$0xff]
    %v689 = vld [vmem:[#allocation8 + $0x250] sm:$0xff]
    %v690 = vld [vmem:[#allocation8 + $0x258] sm:$0xff]
    %v691 = vld [vmem:[#allocation8 + $0x260] sm:$0xff]
    %v692 = vld [vmem:[#allocation8 + $0x268] sm:$0xff]
    %v693 = vld [vmem:[#allocation8 + $0x270] sm:$0xff]
    %v694 = vld [vmem:[#allocation8 + $0x278] sm:$0xff]
    %v695 = vld [vmem:[#allocation8 + $0x280] sm:$0xff]
    %v696 = vld [vmem:[#allocation8 + $0x288] sm:$0xff]
    %v697 = vld [vmem:[#allocation8 + $0x290] sm:$0xff]
    %v698 = vld [vmem:[#allocation8 + $0x298] sm:$0xff]
    %v699 = vld [vmem:[#allocation8 + $0x2a0] sm:$0xff]
    %v700 = vld [vmem:[#allocation8 + $0x2a8] sm:$0xff]
    %v701 = vld [vmem:[#allocation8 + $0x2b0] sm:$0xff]
    %v702 = vld [vmem:[#allocation8 + $0x2b8] sm:$0xff]
    %v703 = vld [vmem:[#allocation8 + $0x2c0] sm:$0xff]
    %v704 = vld [vmem:[#allocation8 + $0x2c8] sm:$0xff]
    %v705 = vld [vmem:[#allocation8 + $0x2d0] sm:$0xff]
    %v706 = vld [vmem:[#allocation8 + $0x2d8] sm:$0xff]
    %v707 = vld [vmem:[#allocation8 + $0x2e0] sm:$0xff]
    %v708 = vld [vmem:[#allocation8 + $0x2e8] sm:$0xff]
    %v709 = vld [vmem:[#allocation8 + $0x2f0] sm:$0xff]
    %v710 = vld [vmem:[#allocation8 + $0x2f8] sm:$0xff]
    %v711 = vld [vmem:[#allocation8 + $0x300] sm:$0xff]
    %v712 = vld [vmem:[#allocation8 + $0x308] sm:$0xff]
    %v713 = vld [vmem:[#allocation8 + $0x310] sm:$0xff]
    %v714 = vld [vmem:[#allocation8 + $0x318] sm:$0xff]
    %v715 = vld [vmem:[#allocation8 + $0x320] sm:$0xff]
    %v716 = vld [vmem:[#allocation8 + $0x328] sm:$0xff]
    %v717 = vld [vmem:[#allocation8 + $0x330] sm:$0xff]
    %v718 = vld [vmem:[#allocation8 + $0x338] sm:$0xff]
    %v719 = vld [vmem:[#allocation8 + $0x340] sm:$0xff]
    %v720 = vld [vmem:[#allocation8 + $0x348] sm:$0xff]
    %v721 = vld [vmem:[#allocation8 + $0x350] sm:$0xff]
    %v722 = vld [vmem:[#allocation8 + $0x358] sm:$0xff]
    %v723 = vld [vmem:[#allocation8 + $0x360] sm:$0xff]
    %v724 = vld [vmem:[#allocation8 + $0x368] sm:$0xff]
    %v725 = vld [vmem:[#allocation8 + $0x370] sm:$0xff]
    %v726 = vld [vmem:[#allocation8 + $0x378] sm:$0xff]
    %v727 = vld [vmem:[#allocation8 + $0x380] sm:$0xff]
    %v728 = vld [vmem:[#allocation8 + $0x388] sm:$0xff]
    %v729 = vld [vmem:[#allocation8 + $0x390] sm:$0xff]
    %v730 = vld [vmem:[#allocation8 + $0x398] sm:$0xff]
    %v731 = vld [vmem:[#allocation8 + $0x3a0] sm:$0xff]
    %v732 = vld [vmem:[#allocation8 + $0x3a8] sm:$0xff]
    %v733 = vld [vmem:[#allocation8 + $0x3b0] sm:$0xff]
    %v734 = vld [vmem:[#allocation8 + $0x3b8] sm:$0xff]
    %v735 = vld [vmem:[#allocation8 + $0x3c0] sm:$0xff]
    %v736 = vld [vmem:[#allocation8 + $0x3c8] sm:$0xff]
    %v737 = vld [vmem:[#allocation8 + $0x3d0] sm:$0xff]
    %v738 = vld [vmem:[#allocation8 + $0x3d8] sm:$0xff]
    %v739 = vld [vmem:[#allocation8 + $0x3e0] sm:$0xff]
    %v740 = vld [vmem:[#allocation8 + $0x3e8] sm:$0xff]
    %v741 = vld [vmem:[#allocation8 + $0x3f0] sm:$0xff]
    %v742 = vld [vmem:[#allocation8 + $0x3f8] sm:$0xff]
    %v744 = vperm.slane %v104, 0
    %v745 = vperm.slane %v104, 1
    %v746 = vperm.slane %v104, 2
    %v747 = vperm.slane %v104, 3
    %v880 = vunpack.c.l.b16 %v615
    %v881 = vunpack.c.h.b16 %v615
    %v882 = vunpack.c.l.b16 %v616
    %v883 = vunpack.c.h.b16 %v616
    %v884 = vunpack.c.l.b16 %v617
    %v885 = vunpack.c.h.b16 %v617
    %v886 = vunpack.c.l.b16 %v618
    %v887 = vunpack.c.h.b16 %v618
    %v888 = vunpack.c.l.b16 %v619
    %v889 = vunpack.c.h.b16 %v619
    %v890 = vunpack.c.l.b16 %v620
    %v891 = vunpack.c.h.b16 %v620
    %v892 = vunpack.c.l.b16 %v621
    %v893 = vunpack.c.h.b16 %v621
    %v894 = vunpack.c.l.b16 %v622
    %v895 = vunpack.c.h.b16 %v622
    %v896 = vunpack.c.l.b16 %v623
    %v897 = vunpack.c.h.b16 %v623
    %v898 = vunpack.c.l.b16 %v624
    %v899 = vunpack.c.h.b16 %v624
    %v900 = vunpack.c.l.b16 %v625
    %v901 = vunpack.c.h.b16 %v625
    %v902 = vunpack.c.l.b16 %v626
    %v903 = vunpack.c.h.b16 %v626
    %v904 = vunpack.c.l.b16 %v627
    %v905 = vunpack.c.h.b16 %v627
    %v906 = vunpack.c.l.b16 %v628
    %v907 = vunpack.c.h.b16 %v628
    %v908 = vunpack.c.l.b16 %v629
    %v909 = vunpack.c.h.b16 %v629
    %v910 = vunpack.c.l.b16 %v630
    %v911 = vunpack.c.h.b16 %v630
    %v912 = vunpack.c.l.b16 %v631
    %v913 = vunpack.c.h.b16 %v631
    %v914 = vunpack.c.l.b16 %v632
    %v915 = vunpack.c.h.b16 %v632
    %v916 = vunpack.c.l.b16 %v633
    %v917 = vunpack.c.h.b16 %v633
    %v918 = vunpack.c.l.b16 %v634
    %v919 = vunpack.c.h.b16 %v634
    %v920 = vunpack.c.l.b16 %v635
    %v921 = vunpack.c.h.b16 %v635
    %v922 = vunpack.c.l.b16 %v636
    %v923 = vunpack.c.h.b16 %v636
    %v924 = vunpack.c.l.b16 %v637
    %v925 = vunpack.c.h.b16 %v637
    %v926 = vunpack.c.l.b16 %v638
    %v927 = vunpack.c.h.b16 %v638
    %v928 = vunpack.c.l.b16 %v639
    %v929 = vunpack.c.h.b16 %v639
    %v930 = vunpack.c.l.b16 %v640
    %v931 = vunpack.c.h.b16 %v640
    %v932 = vunpack.c.l.b16 %v641
    %v933 = vunpack.c.h.b16 %v641
    %v934 = vunpack.c.l.b16 %v642
    %v935 = vunpack.c.h.b16 %v642
    %v936 = vunpack.c.l.b16 %v643
    %v937 = vunpack.c.h.b16 %v643
    %v938 = vunpack.c.l.b16 %v644
    %v939 = vunpack.c.h.b16 %v644
    %v940 = vunpack.c.l.b16 %v645
    %v941 = vunpack.c.h.b16 %v645
    %v942 = vunpack.c.l.b16 %v646
    %v943 = vunpack.c.h.b16 %v646
    %v944 = vunpack.c.l.b16 %v647
    %v945 = vunpack.c.h.b16 %v647
    %v946 = vunpack.c.l.b16 %v648
    %v947 = vunpack.c.h.b16 %v648
    %v948 = vunpack.c.l.b16 %v649
    %v949 = vunpack.c.h.b16 %v649
    %v950 = vunpack.c.l.b16 %v650
    %v951 = vunpack.c.h.b16 %v650
    %v952 = vunpack.c.l.b16 %v651
    %v953 = vunpack.c.h.b16 %v651
    %v954 = vunpack.c.l.b16 %v652
    %v955 = vunpack.c.h.b16 %v652
    %v956 = vunpack.c.l.b16 %v653
    %v957 = vunpack.c.h.b16 %v653
    %v958 = vunpack.c.l.b16 %v654
    %v959 = vunpack.c.h.b16 %v654
    %v960 = vunpack.c.l.b16 %v655
    %v961 = vunpack.c.h.b16 %v655
    %v962 = vunpack.c.l.b16 %v656
    %v963 = vunpack.c.h.b16 %v656
    %v964 = vunpack.c.l.b16 %v657
    %v965 = vunpack.c.h.b16 %v657
    %v966 = vunpack.c.l.b16 %v658
    %v967 = vunpack.c.h.b16 %v658
    %v968 = vunpack.c.l.b16 %v659
    %v969 = vunpack.c.h.b16 %v659
    %v970 = vunpack.c.l.b16 %v660
    %v971 = vunpack.c.h.b16 %v660
    %v972 = vunpack.c.l.b16 %v661
    %v973 = vunpack.c.h.b16 %v661
    %v974 = vunpack.c.l.b16 %v662
    %v975 = vunpack.c.h.b16 %v662
    %v976 = vunpack.c.l.b16 %v663
    %v977 = vunpack.c.h.b16 %v663
    %v978 = vunpack.c.l.b16 %v664
    %v979 = vunpack.c.h.b16 %v664
    %v980 = vunpack.c.l.b16 %v665
    %v981 = vunpack.c.h.b16 %v665
    %v982 = vunpack.c.l.b16 %v666
    %v983 = vunpack.c.h.b16 %v666
    %v984 = vunpack.c.l.b16 %v667
    %v985 = vunpack.c.h.b16 %v667
    %v986 = vunpack.c.l.b16 %v668
    %v987 = vunpack.c.h.b16 %v668
    %v988 = vunpack.c.l.b16 %v669
    %v989 = vunpack.c.h.b16 %v669
    %v990 = vunpack.c.l.b16 %v670
    %v991 = vunpack.c.h.b16 %v670
    %v992 = vunpack.c.l.b16 %v671
    %v993 = vunpack.c.h.b16 %v671
    %v994 = vunpack.c.l.b16 %v672
    %v995 = vunpack.c.h.b16 %v672
    %v996 = vunpack.c.l.b16 %v673
    %v997 = vunpack.c.h.b16 %v673
    %v998 = vunpack.c.l.b16 %v674
    %v999 = vunpack.c.h.b16 %v674
    %v1000 = vunpack.c.l.b16 %v675
    %v1001 = vunpack.c.h.b16 %v675
    %v1002 = vunpack.c.l.b16 %v676
    %v1003 = vunpack.c.h.b16 %v676
    %v1004 = vunpack.c.l.b16 %v677
    %v1005 = vunpack.c.h.b16 %v677
    %v1006 = vunpack.c.l.b16 %v678
    %v1007 = vunpack.c.h.b16 %v678
    %v1008 = vunpack.c.l.b16 %v679
    %v1009 = vunpack.c.h.b16 %v679
    %v1010 = vunpack.c.l.b16 %v680
    %v1011 = vunpack.c.h.b16 %v680
    %v1012 = vunpack.c.l.b16 %v681
    %v1013 = vunpack.c.h.b16 %v681
    %v1014 = vunpack.c.l.b16 %v682
    %v1015 = vunpack.c.h.b16 %v682
    %v1016 = vunpack.c.l.b16 %v683
    %v1017 = vunpack.c.h.b16 %v683
    %v1018 = vunpack.c.l.b16 %v684
    %v1019 = vunpack.c.h.b16 %v684
    %v1020 = vunpack.c.l.b16 %v685
    %v1021 = vunpack.c.h.b16 %v685
    %v1022 = vunpack.c.l.b16 %v686
    %v1023 = vunpack.c.h.b16 %v686
    %v1024 = vunpack.c.l.b16 %v687
    %v1025 = vunpack.c.h.b16 %v687
    %v1026 = vunpack.c.l.b16 %v688
    %v1027 = vunpack.c.h.b16 %v688
    %v1028 = vunpack.c.l.b16 %v689
    %v1029 = vunpack.c.h.b16 %v689
    %v1030 = vunpack.c.l.b16 %v690
    %v1031 = vunpack.c.h.b16 %v690
    %v1032 = vunpack.c.l.b16 %v691
    %v1033 = vunpack.c.h.b16 %v691
    %v1034 = vunpack.c.l.b16 %v692
    %v1035 = vunpack.c.h.b16 %v692
    %v1036 = vunpack.c.l.b16 %v693
    %v1037 = vunpack.c.h.b16 %v693
    %v1038 = vunpack.c.l.b16 %v694
    %v1039 = vunpack.c.h.b16 %v694
    %v1040 = vunpack.c.l.b16 %v695
    %v1041 = vunpack.c.h.b16 %v695
    %v1042 = vunpack.c.l.b16 %v696
    %v1043 = vunpack.c.h.b16 %v696
    %v1044 = vunpack.c.l.b16 %v697
    %v1045 = vunpack.c.h.b16 %v697
    %v1046 = vunpack.c.l.b16 %v698
    %v1047 = vunpack.c.h.b16 %v698
    %v1048 = vunpack.c.l.b16 %v699
    %v1049 = vunpack.c.h.b16 %v699
    %v1050 = vunpack.c.l.b16 %v700
    %v1051 = vunpack.c.h.b16 %v700
    %v1052 = vunpack.c.l.b16 %v701
    %v1053 = vunpack.c.h.b16 %v701
    %v1054 = vunpack.c.l.b16 %v702
    %v1055 = vunpack.c.h.b16 %v702
    %v1056 = vunpack.c.l.b16 %v703
    %v1057 = vunpack.c.h.b16 %v703
    %v1058 = vunpack.c.l.b16 %v704
    %v1059 = vunpack.c.h.b16 %v704
    %v1060 = vunpack.c.l.b16 %v705
    %v1061 = vunpack.c.h.b16 %v705
    %v1062 = vunpack.c.l.b16 %v706
    %v1063 = vunpack.c.h.b16 %v706
    %v1064 = vunpack.c.l.b16 %v707
    %v1065 = vunpack.c.h.b16 %v707
    %v1066 = vunpack.c.l.b16 %v708
    %v1067 = vunpack.c.h.b16 %v708
    %v1068 = vunpack.c.l.b16 %v709
    %v1069 = vunpack.c.h.b16 %v709
    %v1070 = vunpack.c.l.b16 %v710
    %v1071 = vunpack.c.h.b16 %v710
    %v1072 = vunpack.c.l.b16 %v711
    %v1073 = vunpack.c.h.b16 %v711
    %v1074 = vunpack.c.l.b16 %v712
    %v1075 = vunpack.c.h.b16 %v712
    %v1076 = vunpack.c.l.b16 %v713
    %v1077 = vunpack.c.h.b16 %v713
    %v1078 = vunpack.c.l.b16 %v714
    %v1079 = vunpack.c.h.b16 %v714
    %v1080 = vunpack.c.l.b16 %v715
    %v1081 = vunpack.c.h.b16 %v715
    %v1082 = vunpack.c.l.b16 %v716
    %v1083 = vunpack.c.h.b16 %v716
    %v1084 = vunpack.c.l.b16 %v717
    %v1085 = vunpack.c.h.b16 %v717
    %v1086 = vunpack.c.l.b16 %v718
    %v1087 = vunpack.c.h.b16 %v718
    %v1088 = vunpack.c.l.b16 %v719
    %v1089 = vunpack.c.h.b16 %v719
    %v1090 = vunpack.c.l.b16 %v720
    %v1091 = vunpack.c.h.b16 %v720
    %v1092 = vunpack.c.l.b16 %v721
    %v1093 = vunpack.c.h.b16 %v721
    %v1094 = vunpack.c.l.b16 %v722
    %v1095 = vunpack.c.h.b16 %v722
    %v1096 = vunpack.c.l.b16 %v723
    %v1097 = vunpack.c.h.b16 %v723
    %v1098 = vunpack.c.l.b16 %v724
    %v1099 = vunpack.c.h.b16 %v724
    %v1100 = vunpack.c.l.b16 %v725
    %v1101 = vunpack.c.h.b16 %v725
    %v1102 = vunpack.c.l.b16 %v726
    %v1103 = vunpack.c.h.b16 %v726
    %v1104 = vunpack.c.l.b16 %v727
    %v1105 = vunpack.c.h.b16 %v727
    %v1106 = vunpack.c.l.b16 %v728
    %v1107 = vunpack.c.h.b16 %v728
    %v1108 = vunpack.c.l.b16 %v729
    %v1109 = vunpack.c.h.b16 %v729
    %v1110 = vunpack.c.l.b16 %v730
    %v1111 = vunpack.c.h.b16 %v730
    %v1112 = vunpack.c.l.b16 %v731
    %v1113 = vunpack.c.h.b16 %v731
    %v1114 = vunpack.c.l.b16 %v732
    %v1115 = vunpack.c.h.b16 %v732
    %v1116 = vunpack.c.l.b16 %v733
    %v1117 = vunpack.c.h.b16 %v733
    %v1118 = vunpack.c.l.b16 %v734
    %v1119 = vunpack.c.h.b16 %v734
    %v1120 = vunpack.c.l.b16 %v735
    %v1121 = vunpack.c.h.b16 %v735
    %v1122 = vunpack.c.l.b16 %v736
    %v1123 = vunpack.c.h.b16 %v736
    %v1124 = vunpack.c.l.b16 %v737
    %v1125 = vunpack.c.h.b16 %v737
    %v1126 = vunpack.c.l.b16 %v738
    %v1127 = vunpack.c.h.b16 %v738
    %v1128 = vunpack.c.l.b16 %v739
    %v1129 = vunpack.c.h.b16 %v739
    %v1130 = vunpack.c.l.b16 %v740
    %v1131 = vunpack.c.h.b16 %v740
    %v1132 = vunpack.c.l.b16 %v741
    %v1133 = vunpack.c.h.b16 %v741
    %v1134 = vunpack.c.l.b16 %v742
    %v1135 = vunpack.c.h.b16 %v742
    %v1136 = vpack.c.b16 %v884, %v880
    %v1137 = vpack.c.b16 %v885, %v881
    %v1138 = vpack.c.b16 %v886, %v882
    %v1139 = vpack.c.b16 %v887, %v883
    %v1140 = vpack.c.b16 %v892, %v888
    %v1141 = vpack.c.b16 %v893, %v889
    %v1142 = vpack.c.b16 %v894, %v890
    %v1143 = vpack.c.b16 %v895, %v891
    %v1144 = vpack.c.b16 %v900, %v896
    %v1145 = vpack.c.b16 %v901, %v897
    %v1146 = vpack.c.b16 %v902, %v898
    %v1147 = vpack.c.b16 %v903, %v899
    %v1148 = vpack.c.b16 %v908, %v904
    %v1149 = vpack.c.b16 %v909, %v905
    %v1150 = vpack.c.b16 %v910, %v906
    %v1151 = vpack.c.b16 %v911, %v907
    %v1152 = vpack.c.b16 %v916, %v912
    %v1153 = vpack.c.b16 %v917, %v913
    %v1154 = vpack.c.b16 %v918, %v914
    %v1155 = vpack.c.b16 %v919, %v915
    %v1156 = vpack.c.b16 %v924, %v920
    %v1157 = vpack.c.b16 %v925, %v921
    %v1158 = vpack.c.b16 %v926, %v922
    %v1159 = vpack.c.b16 %v927, %v923
    %v1160 = vpack.c.b16 %v932, %v928
    %v1161 = vpack.c.b16 %v933, %v929
    %v1162 = vpack.c.b16 %v934, %v930
    %v1163 = vpack.c.b16 %v935, %v931
    %v1164 = vpack.c.b16 %v940, %v936
    %v1165 = vpack.c.b16 %v941, %v937
    %v1166 = vpack.c.b16 %v942, %v938
    %v1167 = vpack.c.b16 %v943, %v939
    %v1168 = vpack.c.b16 %v948, %v944
    %v1169 = vpack.c.b16 %v949, %v945
    %v1170 = vpack.c.b16 %v950, %v946
    %v1171 = vpack.c.b16 %v951, %v947
    %v1172 = vpack.c.b16 %v956, %v952
    %v1173 = vpack.c.b16 %v957, %v953
    %v1174 = vpack.c.b16 %v958, %v954
    %v1175 = vpack.c.b16 %v959, %v955
    %v1176 = vpack.c.b16 %v964, %v960
    %v1177 = vpack.c.b16 %v965, %v961
    %v1178 = vpack.c.b16 %v966, %v962
    %v1179 = vpack.c.b16 %v967, %v963
    %v1180 = vpack.c.b16 %v972, %v968
    %v1181 = vpack.c.b16 %v973, %v969
    %v1182 = vpack.c.b16 %v974, %v970
    %v1183 = vpack.c.b16 %v975, %v971
    %v1184 = vpack.c.b16 %v980, %v976
    %v1185 = vpack.c.b16 %v981, %v977
    %v1186 = vpack.c.b16 %v982, %v978
    %v1187 = vpack.c.b16 %v983, %v979
    %v1188 = vpack.c.b16 %v988, %v984
    %v1189 = vpack.c.b16 %v989, %v985
    %v1190 = vpack.c.b16 %v990, %v986
    %v1191 = vpack.c.b16 %v991, %v987
    %v1192 = vpack.c.b16 %v996, %v992
    %v1193 = vpack.c.b16 %v997, %v993
    %v1194 = vpack.c.b16 %v998, %v994
    %v1195 = vpack.c.b16 %v999, %v995
    %v1196 = vpack.c.b16 %v1004, %v1000
    %v1197 = vpack.c.b16 %v1005, %v1001
    %v1198 = vpack.c.b16 %v1006, %v1002
    %v1199 = vpack.c.b16 %v1007, %v1003
    %v1200 = vpack.c.b16 %v1012, %v1008
    %v1201 = vpack.c.b16 %v1013, %v1009
    %v1202 = vpack.c.b16 %v1014, %v1010
    %v1203 = vpack.c.b16 %v1015, %v1011
    %v1204 = vpack.c.b16 %v1020, %v1016
    %v1205 = vpack.c.b16 %v1021, %v1017
    %v1206 = vpack.c.b16 %v1022, %v1018
    %v1207 = vpack.c.b16 %v1023, %v1019
    %v1208 = vpack.c.b16 %v1028, %v1024
    %v1209 = vpack.c.b16 %v1029, %v1025
    %v1210 = vpack.c.b16 %v1030, %v1026
    %v1211 = vpack.c.b16 %v1031, %v1027
    %v1212 = vpack.c.b16 %v1036, %v1032
    %v1213 = vpack.c.b16 %v1037, %v1033
    %v1214 = vpack.c.b16 %v1038, %v1034
    %v1215 = vpack.c.b16 %v1039, %v1035
    %v1216 = vpack.c.b16 %v1044, %v1040
    %v1217 = vpack.c.b16 %v1045, %v1041
    %v1218 = vpack.c.b16 %v1046, %v1042
    %v1219 = vpack.c.b16 %v1047, %v1043
    %v1220 = vpack.c.b16 %v1052, %v1048
    %v1221 = vpack.c.b16 %v1053, %v1049
    %v1222 = vpack.c.b16 %v1054, %v1050
    %v1223 = vpack.c.b16 %v1055, %v1051
    %v1224 = vpack.c.b16 %v1060, %v1056
    %v1225 = vpack.c.b16 %v1061, %v1057
    %v1226 = vpack.c.b16 %v1062, %v1058
    %v1227 = vpack.c.b16 %v1063, %v1059
    %v1228 = vpack.c.b16 %v1068, %v1064
    %v1229 = vpack.c.b16 %v1069, %v1065
    %v1230 = vpack.c.b16 %v1070, %v1066
    %v1231 = vpack.c.b16 %v1071, %v1067
    %v1232 = vpack.c.b16 %v1076, %v1072
    %v1233 = vpack.c.b16 %v1077, %v1073
    %v1234 = vpack.c.b16 %v1078, %v1074
    %v1235 = vpack.c.b16 %v1079, %v1075
    %v1236 = vpack.c.b16 %v1084, %v1080
    %v1237 = vpack.c.b16 %v1085, %v1081
    %v1238 = vpack.c.b16 %v1086, %v1082
    %v1239 = vpack.c.b16 %v1087, %v1083
    %v1240 = vpack.c.b16 %v1092, %v1088
    %v1241 = vpack.c.b16 %v1093, %v1089
    %v1242 = vpack.c.b16 %v1094, %v1090
    %v1243 = vpack.c.b16 %v1095, %v1091
    %v1244 = vpack.c.b16 %v1100, %v1096
    %v1245 = vpack.c.b16 %v1101, %v1097
    %v1246 = vpack.c.b16 %v1102, %v1098
    %v1247 = vpack.c.b16 %v1103, %v1099
    %v1248 = vpack.c.b16 %v1108, %v1104
    %v1249 = vpack.c.b16 %v1109, %v1105
    %v1250 = vpack.c.b16 %v1110, %v1106
    %v1251 = vpack.c.b16 %v1111, %v1107
    %v1252 = vpack.c.b16 %v1116, %v1112
    %v1253 = vpack.c.b16 %v1117, %v1113
    %v1254 = vpack.c.b16 %v1118, %v1114
    %v1255 = vpack.c.b16 %v1119, %v1115
    %v1256 = vpack.c.b16 %v1124, %v1120
    %v1257 = vpack.c.b16 %v1125, %v1121
    %v1258 = vpack.c.b16 %v1126, %v1122
    %v1259 = vpack.c.b16 %v1127, %v1123
    %v1260 = vpack.c.b16 %v1132, %v1128
    %v1261 = vpack.c.b16 %v1133, %v1129
    %v1262 = vpack.c.b16 %v1134, %v1130
    %v1263 = vpack.c.b16 %v1135, %v1131
    %1392 = vmatpush.bf16.msra.mxu0 %v1164
    %1393 = vmatpush.bf16.msra.mxu0 %v1160
    %1394 = vmatpush.bf16.msra.mxu0 %v1156
    %1395 = vmatpush.bf16.msra.mxu0 %v1152
    %1396 = vmatpush.bf16.msra.mxu0 %v1148
    %1397 = vmatpush.bf16.msra.mxu0 %v1144
    %1398 = vmatpush.bf16.msra.mxu0 %v1140
    %1399 = vmatpush.bf16.msra.mxu0 %v1136
    %1400 = vmatmul.bf16.gmra.mxu0 %v611
    %v1401 = vpop.f32.mrf.mxu0
    %v1402 = vadd.f32 %v744, %v1401
    %v1403 = vpop.f32.mrf.mxu0
    %1404 = vdwg.mxu0
    %1405 = vmatpush.bf16.msra.mxu0 %v1196
    %1406 = vmatpush.bf16.msra.mxu0 %v1192
    %1407 = vmatpush.bf16.msra.mxu0 %v1188
    %1408 = vmatpush.bf16.msra.mxu0 %v1184
    %1409 = vmatpush.bf16.msra.mxu0 %v1180
    %1410 = vmatpush.bf16.msra.mxu0 %v1176
    %1411 = vmatpush.bf16.msra.mxu0 %v1172
    %1412 = vmatpush.bf16.msra.mxu0 %v1168
    %1413 = vmatmul.bf16.gmra.mxu0 %v612
    %v1414 = vpop.f32.mrf.mxu0
    %v1415 = vadd.f32 %v1402, %v1414
    %v1416 = vpop.f32.mrf.mxu0
    %1417 = vdwg.mxu0
    %1418 = vmatpush.bf16.msra.mxu0 %v1228
    %1419 = vmatpush.bf16.msra.mxu0 %v1224
    %1420 = vmatpush.bf16.msra.mxu0 %v1220
    %1421 = vmatpush.bf16.msra.mxu0 %v1216
    %1422 = vmatpush.bf16.msra.mxu0 %v1212
    %1423 = vmatpush.bf16.msra.mxu0 %v1208
    %1424 = vmatpush.bf16.msra.mxu0 %v1204
    %1425 = vmatpush.bf16.msra.mxu0 %v1200
    %1426 = vmatmul.bf16.gmra.mxu0 %v613
    %v1427 = vpop.f32.mrf.mxu0
    %v1428 = vadd.f32 %v1415, %v1427
    %v1429 = vpop.f32.mrf.mxu0
    %1430 = vdwg.mxu0
    %1431 = vmatpush.bf16.msra.mxu0 %v1260
    %1432 = vmatpush.bf16.msra.mxu0 %v1256
    %1433 = vmatpush.bf16.msra.mxu0 %v1252
    %1434 = vmatpush.bf16.msra.mxu0 %v1248
    %1435 = vmatpush.bf16.msra.mxu0 %v1244
    %1436 = vmatpush.bf16.msra.mxu0 %v1240
    %1437 = vmatpush.bf16.msra.mxu0 %v1236
    %1438 = vmatpush.bf16.msra.mxu0 %v1232
    %1439 = vmatmul.bf16.gmra.mxu0 %v614
    %v1440 = vpop.f32.mrf.mxu0
    %v1441 = vadd.f32 %v1428, %v1440
    %v1442 = vpop.f32.mrf.mxu0
    %1443 = vdwg.mxu0
    %1444 = vmatpush.bf16.msra.mxu0 %v1165
    %1445 = vmatpush.bf16.msra.mxu0 %v1161
    %1446 = vmatpush.bf16.msra.mxu0 %v1157
    %1447 = vmatpush.bf16.msra.mxu0 %v1153
    %1448 = vmatpush.bf16.msra.mxu0 %v1149
    %1449 = vmatpush.bf16.msra.mxu0 %v1145
    %1450 = vmatpush.bf16.msra.mxu0 %v1141
    %1451 = vmatpush.bf16.msra.mxu0 %v1137
    %1452 = vmatmul.bf16.gmra.mxu0 %v611
    %v1453 = vpop.f32.mrf.mxu0
    %v1454 = vadd.f32 %v745, %v1453
    %v1455 = vpop.f32.mrf.mxu0
    %1456 = vdwg.mxu0
    %1457 = vmatpush.bf16.msra.mxu0 %v1197
    %1458 = vmatpush.bf16.msra.mxu0 %v1193
    %1459 = vmatpush.bf16.msra.mxu0 %v1189
    %1460 = vmatpush.bf16.msra.mxu0 %v1185
    %1461 = vmatpush.bf16.msra.mxu0 %v1181
    %1462 = vmatpush.bf16.msra.mxu0 %v1177
    %1463 = vmatpush.bf16.msra.mxu0 %v1173
    %1464 = vmatpush.bf16.msra.mxu0 %v1169
    %1465 = vmatmul.bf16.gmra.mxu0 %v612
    %v1466 = vpop.f32.mrf.mxu0
    %v1467 = vadd.f32 %v1454, %v1466
    %v1468 = vpop.f32.mrf.mxu0
    %1469 = vdwg.mxu0
    %1470 = vmatpush.bf16.msra.mxu0 %v1229
    %1471 = vmatpush.bf16.msra.mxu0 %v1225
    %1472 = vmatpush.bf16.msra.mxu0 %v1221
    %1473 = vmatpush.bf16.msra.mxu0 %v1217
    %1474 = vmatpush.bf16.msra.mxu0 %v1213
    %1475 = vmatpush.bf16.msra.mxu0 %v1209
    %1476 = vmatpush.bf16.msra.mxu0 %v1205
    %1477 = vmatpush.bf16.msra.mxu0 %v1201
    %1478 = vmatmul.bf16.gmra.mxu0 %v613
    %v1479 = vpop.f32.mrf.mxu0
    %v1480 = vadd.f32 %v1467, %v1479
    %v1481 = vpop.f32.mrf.mxu0
    %1482 = vdwg.mxu0
    %1483 = vmatpush.bf16.msra.mxu0 %v1261
    %1484 = vmatpush.bf16.msra.mxu0 %v1257
    %1485 = vmatpush.bf16.msra.mxu0 %v1253
    %1486 = vmatpush.bf16.msra.mxu0 %v1249
    %1487 = vmatpush.bf16.msra.mxu0 %v1245
    %1488 = vmatpush.bf16.msra.mxu0 %v1241
    %1489 = vmatpush.bf16.msra.mxu0 %v1237
    %1490 = vmatpush.bf16.msra.mxu0 %v1233
    %1491 = vmatmul.bf16.gmra.mxu0 %v614
    %v1492 = vpop.f32.mrf.mxu0
    %v1493 = vadd.f32 %v1480, %v1492
    %v1494 = vpop.f32.mrf.mxu0
    %1495 = vdwg.mxu0
    %1496 = vmatpush.bf16.msra.mxu0 %v1166
    %1497 = vmatpush.bf16.msra.mxu0 %v1162
    %1498 = vmatpush.bf16.msra.mxu0 %v1158
    %1499 = vmatpush.bf16.msra.mxu0 %v1154
    %1500 = vmatpush.bf16.msra.mxu0 %v1150
    %1501 = vmatpush.bf16.msra.mxu0 %v1146
    %1502 = vmatpush.bf16.msra.mxu0 %v1142
    %1503 = vmatpush.bf16.msra.mxu0 %v1138
    %1504 = vmatmul.bf16.gmra.mxu0 %v611
    %v1505 = vpop.f32.mrf.mxu0
    %v1506 = vadd.f32 %v746, %v1505
    %v1507 = vpop.f32.mrf.mxu0
    %1508 = vdwg.mxu0
    %1509 = vmatpush.bf16.msra.mxu0 %v1198
    %1510 = vmatpush.bf16.msra.mxu0 %v1194
    %1511 = vmatpush.bf16.msra.mxu0 %v1190
    %1512 = vmatpush.bf16.msra.mxu0 %v1186
    %1513 = vmatpush.bf16.msra.mxu0 %v1182
    %1514 = vmatpush.bf16.msra.mxu0 %v1178
    %1515 = vmatpush.bf16.msra.mxu0 %v1174
    %1516 = vmatpush.bf16.msra.mxu0 %v1170
    %1517 = vmatmul.bf16.gmra.mxu0 %v612
    %v1518 = vpop.f32.mrf.mxu0
    %v1519 = vadd.f32 %v1506, %v1518
    %v1520 = vpop.f32.mrf.mxu0
    %1521 = vdwg.mxu0
    %1522 = vmatpush.bf16.msra.mxu0 %v1230
    %1523 = vmatpush.bf16.msra.mxu0 %v1226
    %1524 = vmatpush.bf16.msra.mxu0 %v1222
    %1525 = vmatpush.bf16.msra.mxu0 %v1218
    %1526 = vmatpush.bf16.msra.mxu0 %v1214
    %1527 = vmatpush.bf16.msra.mxu0 %v1210
    %1528 = vmatpush.bf16.msra.mxu0 %v1206
    %1529 = vmatpush.bf16.msra.mxu0 %v1202
    %1530 = vmatmul.bf16.gmra.mxu0 %v613
    %v1531 = vpop.f32.mrf.mxu0
    %v1532 = vadd.f32 %v1519, %v1531
    %v1533 = vpop.f32.mrf.mxu0
    %1534 = vdwg.mxu0
    %1535 = vmatpush.bf16.msra.mxu0 %v1262
    %1536 = vmatpush.bf16.msra.mxu0 %v1258
    %1537 = vmatpush.bf16.msra.mxu0 %v1254
    %1538 = vmatpush.bf16.msra.mxu0 %v1250
    %1539 = vmatpush.bf16.msra.mxu0 %v1246
    %1540 = vmatpush.bf16.msra.mxu0 %v1242
    %1541 = vmatpush.bf16.msra.mxu0 %v1238
    %1542 = vmatpush.bf16.msra.mxu0 %v1234
    %1543 = vmatmul.bf16.gmra.mxu0 %v614
    %v1544 = vpop.f32.mrf.mxu0
    %v1545 = vadd.f32 %v1532, %v1544
    %v1546 = vpop.f32.mrf.mxu0
    %1547 = vdwg.mxu0
    %1548 = vmatpush.bf16.msra.mxu0 %v1167
    %1549 = vmatpush.bf16.msra.mxu0 %v1163
    %1550 = vmatpush.bf16.msra.mxu0 %v1159
    %1551 = vmatpush.bf16.msra.mxu0 %v1155
    %1552 = vmatpush.bf16.msra.mxu0 %v1151
    %1553 = vmatpush.bf16.msra.mxu0 %v1147
    %1554 = vmatpush.bf16.msra.mxu0 %v1143
    %1555 = vmatpush.bf16.msra.mxu0 %v1139
    %1556 = vmatmul.bf16.gmra.mxu0 %v611
    %v1557 = vpop.f32.mrf.mxu0
    %v1558 = vadd.f32 %v747, %v1557
    %v1559 = vpop.f32.mrf.mxu0
    %1560 = vdwg.mxu0
    %1561 = vmatpush.bf16.msra.mxu0 %v1199
    %1562 = vmatpush.bf16.msra.mxu0 %v1195
    %1563 = vmatpush.bf16.msra.mxu0 %v1191
    %1564 = vmatpush.bf16.msra.mxu0 %v1187
    %1565 = vmatpush.bf16.msra.mxu0 %v1183
    %1566 = vmatpush.bf16.msra.mxu0 %v1179
    %1567 = vmatpush.bf16.msra.mxu0 %v1175
    %1568 = vmatpush.bf16.msra.mxu0 %v1171
    %1569 = vmatmul.bf16.gmra.mxu0 %v612
    %v1570 = vpop.f32.mrf.mxu0
    %v1571 = vadd.f32 %v1558, %v1570
    %v1572 = vpop.f32.mrf.mxu0
    %1573 = vdwg.mxu0
    %1574 = vmatpush.bf16.msra.mxu0 %v1231
    %1575 = vmatpush.bf16.msra.mxu0 %v1227
    %1576 = vmatpush.bf16.msra.mxu0 %v1223
    %1577 = vmatpush.bf16.msra.mxu0 %v1219
    %1578 = vmatpush.bf16.msra.mxu0 %v1215
    %1579 = vmatpush.bf16.msra.mxu0 %v1211
    %1580 = vmatpush.bf16.msra.mxu0 %v1207
    %1581 = vmatpush.bf16.msra.mxu0 %v1203
    %1582 = vmatmul.bf16.gmra.mxu0 %v613
    %v1583 = vpop.f32.mrf.mxu0
    %v1584 = vadd.f32 %v1571, %v1583
    %v1585 = vpop.f32.mrf.mxu0
    %1586 = vdwg.mxu0
    %1587 = vmatpush.bf16.msra.mxu0 %v1263
    %1588 = vmatpush.bf16.msra.mxu0 %v1259
    %1589 = vmatpush.bf16.msra.mxu0 %v1255
    %1590 = vmatpush.bf16.msra.mxu0 %v1251
    %1591 = vmatpush.bf16.msra.mxu0 %v1247
    %1592 = vmatpush.bf16.msra.mxu0 %v1243
    %1593 = vmatpush.bf16.msra.mxu0 %v1239
    %1594 = vmatpush.bf16.msra.mxu0 %v1235
    %1595 = vmatmul.bf16.gmra.mxu0 %v614
    %v1596 = vpop.f32.mrf.mxu0
    %v1597 = vadd.f32 %v1584, %v1596
    %v1598 = vpop.f32.mrf.mxu0
    %1599 = vdwg.mxu0
    %v1600 = vmax.f32 %v1441, 0.0
    %v1601 = vmax.f32 %v1493, 0.0
    %v1602 = vmax.f32 %v1545, 0.0
    %v1603 = vmax.f32 %v1597, 0.0
    %v1604 = vpack.c.bf16 %v1600, %v1600
    %v1605 = vpack.c.bf16 %v1601, %v1601
    %v1606 = vpack.c.bf16 %v1602, %v1602
    %v1607 = vpack.c.bf16 %v1603, %v1603
    %v1608 = vld [vmem:[#allocation9] sm:$0xf]
    %v1609 = vld [vmem:[#allocation9 + $0x4] sm:$0xf]
    %v1610 = vld [vmem:[#allocation9 + $0x8] sm:$0xf]
    %v1611 = vld [vmem:[#allocation9 + $0xc] sm:$0xf]
    %v1612 = vld [vmem:[#allocation9 + $0x10] sm:$0xf]
    %v1613 = vld [vmem:[#allocation9 + $0x14] sm:$0xf]
    %v1614 = vld [vmem:[#allocation9 + $0x18] sm:$0xf]
    %v1615 = vld [vmem:[#allocation9 + $0x1c] sm:$0xf]
    %v1616 = vld [vmem:[#allocation9 + $0x20] sm:$0xf]
    %v1617 = vld [vmem:[#allocation9 + $0x24] sm:$0xf]
    %v1618 = vld [vmem:[#allocation9 + $0x28] sm:$0xf]
    %v1619 = vld [vmem:[#allocation9 + $0x2c] sm:$0xf]
    %v1620 = vld [vmem:[#allocation9 + $0x30] sm:$0xf]
    %v1621 = vld [vmem:[#allocation9 + $0x34] sm:$0xf]
    %v1622 = vld [vmem:[#allocation9 + $0x38] sm:$0xf]
    %v1623 = vld [vmem:[#allocation9 + $0x3c] sm:$0xf]
    %v1624 = vld [vmem:[#allocation9 + $0x40] sm:$0xf]
    %v1625 = vld [vmem:[#allocation9 + $0x44] sm:$0xf]
    %v1626 = vld [vmem:[#allocation9 + $0x48] sm:$0xf]
    %v1627 = vld [vmem:[#allocation9 + $0x4c] sm:$0xf]
    %v1628 = vld [vmem:[#allocation9 + $0x50] sm:$0xf]
    %v1629 = vld [vmem:[#allocation9 + $0x54] sm:$0xf]
    %v1630 = vld [vmem:[#allocation9 + $0x58] sm:$0xf]
    %v1631 = vld [vmem:[#allocation9 + $0x5c] sm:$0xf]
    %v1632 = vld [vmem:[#allocation9 + $0x60] sm:$0xf]
    %v1633 = vld [vmem:[#allocation9 + $0x64] sm:$0xf]
    %v1634 = vld [vmem:[#allocation9 + $0x68] sm:$0xf]
    %v1635 = vld [vmem:[#allocation9 + $0x6c] sm:$0xf]
    %v1636 = vld [vmem:[#allocation9 + $0x70] sm:$0xf]
    %v1637 = vld [vmem:[#allocation9 + $0x74] sm:$0xf]
    %v1638 = vld [vmem:[#allocation9 + $0x78] sm:$0xf]
    %v1639 = vld [vmem:[#allocation9 + $0x7c] sm:$0xf]
    %v1640 = vld [vmem:[#allocation9 + $0x80] sm:$0xf]
    %v1641 = vld [vmem:[#allocation9 + $0x84] sm:$0xf]
    %v1642 = vld [vmem:[#allocation9 + $0x88] sm:$0xf]
    %v1643 = vld [vmem:[#allocation9 + $0x8c] sm:$0xf]
    %v1644 = vld [vmem:[#allocation9 + $0x90] sm:$0xf]
    %v1645 = vld [vmem:[#allocation9 + $0x94] sm:$0xf]
    %v1646 = vld [vmem:[#allocation9 + $0x98] sm:$0xf]
    %v1647 = vld [vmem:[#allocation9 + $0x9c] sm:$0xf]
    %v1648 = vld [vmem:[#allocation9 + $0xa0] sm:$0xf]
    %v1649 = vld [vmem:[#allocation9 + $0xa4] sm:$0xf]
    %v1650 = vld [vmem:[#allocation9 + $0xa8] sm:$0xf]
    %v1651 = vld [vmem:[#allocation9 + $0xac] sm:$0xf]
    %v1652 = vld [vmem:[#allocation9 + $0xb0] sm:$0xf]
    %v1653 = vld [vmem:[#allocation9 + $0xb4] sm:$0xf]
    %v1654 = vld [vmem:[#allocation9 + $0xb8] sm:$0xf]
    %v1655 = vld [vmem:[#allocation9 + $0xbc] sm:$0xf]
    %v1656 = vld [vmem:[#allocation9 + $0xc0] sm:$0xf]
    %v1657 = vld [vmem:[#allocation9 + $0xc4] sm:$0xf]
    %v1658 = vld [vmem:[#allocation9 + $0xc8] sm:$0xf]
    %v1659 = vld [vmem:[#allocation9 + $0xcc] sm:$0xf]
    %v1660 = vld [vmem:[#allocation9 + $0xd0] sm:$0xf]
    %v1661 = vld [vmem:[#allocation9 + $0xd4] sm:$0xf]
    %v1662 = vld [vmem:[#allocation9 + $0xd8] sm:$0xf]
    %v1663 = vld [vmem:[#allocation9 + $0xdc] sm:$0xf]
    %v1664 = vld [vmem:[#allocation9 + $0xe0] sm:$0xf]
    %v1665 = vld [vmem:[#allocation9 + $0xe4] sm:$0xf]
    %v1666 = vld [vmem:[#allocation9 + $0xe8] sm:$0xf]
    %v1667 = vld [vmem:[#allocation9 + $0xec] sm:$0xf]
    %v1668 = vld [vmem:[#allocation9 + $0xf0] sm:$0xf]
    %v1669 = vld [vmem:[#allocation9 + $0xf4] sm:$0xf]
    %v1670 = vld [vmem:[#allocation9 + $0xf8] sm:$0xf]
    %v1671 = vld [vmem:[#allocation9 + $0xfc] sm:$0xf]
    %v1673 = vperm.slane %v105, 0
    %v1739 = vunpack.c.l.b16 %v1608
    %v1740 = vunpack.c.l.b16 %v1609
    %v1741 = vunpack.c.l.b16 %v1610
    %v1742 = vunpack.c.l.b16 %v1611
    %v1743 = vunpack.c.l.b16 %v1612
    %v1744 = vunpack.c.l.b16 %v1613
    %v1745 = vunpack.c.l.b16 %v1614
    %v1746 = vunpack.c.l.b16 %v1615
    %v1747 = vunpack.c.l.b16 %v1616
    %v1748 = vunpack.c.l.b16 %v1617
    %v1749 = vunpack.c.l.b16 %v1618
    %v1750 = vunpack.c.l.b16 %v1619
    %v1751 = vunpack.c.l.b16 %v1620
    %v1752 = vunpack.c.l.b16 %v1621
    %v1753 = vunpack.c.l.b16 %v1622
    %v1754 = vunpack.c.l.b16 %v1623
    %v1755 = vunpack.c.l.b16 %v1624
    %v1756 = vunpack.c.l.b16 %v1625
    %v1757 = vunpack.c.l.b16 %v1626
    %v1758 = vunpack.c.l.b16 %v1627
    %v1759 = vunpack.c.l.b16 %v1628
    %v1760 = vunpack.c.l.b16 %v1629
    %v1761 = vunpack.c.l.b16 %v1630
    %v1762 = vunpack.c.l.b16 %v1631
    %v1763 = vunpack.c.l.b16 %v1632
    %v1764 = vunpack.c.l.b16 %v1633
    %v1765 = vunpack.c.l.b16 %v1634
    %v1766 = vunpack.c.l.b16 %v1635
    %v1767 = vunpack.c.l.b16 %v1636
    %v1768 = vunpack.c.l.b16 %v1637
    %v1769 = vunpack.c.l.b16 %v1638
    %v1770 = vunpack.c.l.b16 %v1639
    %v1771 = vunpack.c.l.b16 %v1640
    %v1772 = vunpack.c.l.b16 %v1641
    %v1773 = vunpack.c.l.b16 %v1642
    %v1774 = vunpack.c.l.b16 %v1643
    %v1775 = vunpack.c.l.b16 %v1644
    %v1776 = vunpack.c.l.b16 %v1645
    %v1777 = vunpack.c.l.b16 %v1646
    %v1778 = vunpack.c.l.b16 %v1647
    %v1779 = vunpack.c.l.b16 %v1648
    %v1780 = vunpack.c.l.b16 %v1649
    %v1781 = vunpack.c.l.b16 %v1650
    %v1782 = vunpack.c.l.b16 %v1651
    %v1783 = vunpack.c.l.b16 %v1652
    %v1784 = vunpack.c.l.b16 %v1653
    %v1785 = vunpack.c.l.b16 %v1654
    %v1786 = vunpack.c.l.b16 %v1655
    %v1787 = vunpack.c.l.b16 %v1656
    %v1788 = vunpack.c.l.b16 %v1657
    %v1789 = vunpack.c.l.b16 %v1658
    %v1790 = vunpack.c.l.b16 %v1659
    %v1791 = vunpack.c.l.b16 %v1660
    %v1792 = vunpack.c.l.b16 %v1661
    %v1793 = vunpack.c.l.b16 %v1662
    %v1794 = vunpack.c.l.b16 %v1663
    %v1795 = vunpack.c.l.b16 %v1664
    %v1796 = vunpack.c.l.b16 %v1665
    %v1797 = vunpack.c.l.b16 %v1666
    %v1798 = vunpack.c.l.b16 %v1667
    %v1799 = vunpack.c.l.b16 %v1668
    %v1800 = vunpack.c.l.b16 %v1669
    %v1801 = vunpack.c.l.b16 %v1670
    %v1802 = vunpack.c.l.b16 %v1671
    %v1803 = vpack.c.b16 %v1740, %v1739
    %v1804 = vpack.c.b16 %v1742, %v1741
    %v1805 = vpack.c.b16 %v1744, %v1743
    %v1806 = vpack.c.b16 %v1746, %v1745
    %v1807 = vpack.c.b16 %v1748, %v1747
    %v1808 = vpack.c.b16 %v1750, %v1749
    %v1809 = vpack.c.b16 %v1752, %v1751
    %v1810 = vpack.c.b16 %v1754, %v1753
    %v1811 = vpack.c.b16 %v1756, %v1755
    %v1812 = vpack.c.b16 %v1758, %v1757
    %v1813 = vpack.c.b16 %v1760, %v1759
    %v1814 = vpack.c.b16 %v1762, %v1761
    %v1815 = vpack.c.b16 %v1764, %v1763
    %v1816 = vpack.c.b16 %v1766, %v1765
    %v1817 = vpack.c.b16 %v1768, %v1767
    %v1818 = vpack.c.b16 %v1770, %v1769
    %v1819 = vpack.c.b16 %v1772, %v1771
    %v1820 = vpack.c.b16 %v1774, %v1773
    %v1821 = vpack.c.b16 %v1776, %v1775
    %v1822 = vpack.c.b16 %v1778, %v1777
    %v1823 = vpack.c.b16 %v1780, %v1779
    %v1824 = vpack.c.b16 %v1782, %v1781
    %v1825 = vpack.c.b16 %v1784, %v1783
    %v1826 = vpack.c.b16 %v1786, %v1785
    %v1827 = vpack.c.b16 %v1788, %v1787
    %v1828 = vpack.c.b16 %v1790, %v1789
    %v1829 = vpack.c.b16 %v1792, %v1791
    %v1830 = vpack.c.b16 %v1794, %v1793
    %v1831 = vpack.c.b16 %v1796, %v1795
    %v1832 = vpack.c.b16 %v1798, %v1797
    %v1833 = vpack.c.b16 %v1800, %v1799
    %v1834 = vpack.c.b16 %v1802, %v1801
    %1867 = vmatpush.bf16.msra.mxu0 %v1810
    %1868 = vmatpush.bf16.msra.mxu0 %v1809
    %1869 = vmatpush.bf16.msra.mxu0 %v1808
    %1870 = vmatpush.bf16.msra.mxu0 %v1807
    %1871 = vmatpush.bf16.msra.mxu0 %v1806
    %1872 = vmatpush.bf16.msra.mxu0 %v1805
    %1873 = vmatpush.bf16.msra.mxu0 %v1804
    %1874 = vmatpush.bf16.msra.mxu0 %v1803
    %1875 = vmatmul.bf16.gmra.mxu0 %v1604
    %v1876 = vpop.f32.mrf.mxu0
    %v1877 = vadd.f32 %v1673, %v1876
    %v1878 = vpop.f32.mrf.mxu0
    %1879 = vdwg.mxu0
    %1880 = vmatpush.bf16.msra.mxu0 %v1818
    %1881 = vmatpush.bf16.msra.mxu0 %v1817
    %1882 = vmatpush.bf16.msra.mxu0 %v1816
    %1883 = vmatpush.bf16.msra.mxu0 %v1815
    %1884 = vmatpush.bf16.msra.mxu0 %v1814
    %1885 = vmatpush.bf16.msra.mxu0 %v1813
    %1886 = vmatpush.bf16.msra.mxu0 %v1812
    %1887 = vmatpush.bf16.msra.mxu0 %v1811
    %1888 = vmatmul.bf16.gmra.mxu0 %v1605
    %v1889 = vpop.f32.mrf.mxu0
    %v1890 = vadd.f32 %v1877, %v1889
    %v1891 = vpop.f32.mrf.mxu0
    %1892 = vdwg.mxu0
    %1893 = vmatpush.bf16.msra.mxu0 %v1826
    %1894 = vmatpush.bf16.msra.mxu0 %v1825
    %1895 = vmatpush.bf16.msra.mxu0 %v1824
    %1896 = vmatpush.bf16.msra.mxu0 %v1823
    %1897 = vmatpush.bf16.msra.mxu0 %v1822
    %1898 = vmatpush.bf16.msra.mxu0 %v1821
    %1899 = vmatpush.bf16.msra.mxu0 %v1820
    %1900 = vmatpush.bf16.msra.mxu0 %v1819
    %1901 = vmatmul.bf16.gmra.mxu0 %v1606
    %v1902 = vpop.f32.mrf.mxu0
    %v1903 = vadd.f32 %v1890, %v1902
    %v1904 = vpop.f32.mrf.mxu0
    %1905 = vdwg.mxu0
    %1906 = vmatpush.bf16.msra.mxu0 %v1834
    %1907 = vmatpush.bf16.msra.mxu0 %v1833
    %1908 = vmatpush.bf16.msra.mxu0 %v1832
    %1909 = vmatpush.bf16.msra.mxu0 %v1831
    %1910 = vmatpush.bf16.msra.mxu0 %v1830
    %1911 = vmatpush.bf16.msra.mxu0 %v1829
    %1912 = vmatpush.bf16.msra.mxu0 %v1828
    %1913 = vmatpush.bf16.msra.mxu0 %v1827
    %1914 = vmatmul.bf16.gmra.mxu0 %v1607
    %v1915 = vpop.f32.mrf.mxu0
    %v1916 = vadd.f32 %v1903, %v1915
    %v1917 = vpop.f32.mrf.mxu0
    %1918 = vdwg.mxu0
    %v1919 = vmax.f32 %v1916, 0.0
    %v1920 = vpack.c.bf16 %v1919, %v1919
    %v1921 = vld [vmem:[%s4] sm:$0x1]
    %s1922 = sld [smem:[#allocation2]]
    %v1923 = vstv %s1922
    %1924 = vmatpush.bf16.xpose.msra.mxu0 0
    %1925 = vmatpush.bf16.xpose.msra.mxu0 0
    %1926 = vmatpush.bf16.xpose.msra.mxu0 0
    %1927 = vmatpush.bf16.xpose.msra.mxu0 0
    %1928 = vmatpush.bf16.xpose.msra.mxu0 0
    %1929 = vmatpush.bf16.xpose.msra.mxu0 0
    %1930 = vmatpush.bf16.xpose.msra.mxu0 0
    %1931 = vmatpush.bf16.xpose.msra.mxu0 %v1920
    %1932 = vmatmul.bf16.gmra.mxu0 %v1921
    %v1933 = vpop.f32.mrf.mxu0
    %v1934 = vadd.f32 %v1923, %v1933
    %v1935 = vpop.f32.mrf.mxu0
    %1936 = vdwg.mxu0
    %vm1937 = vcmask 57344
    %1938 = vst.msk [vmem:[#allocation12] sm:$0x1] %vm1937, %v1934
    // Predicated region
    $region50: #{mlp_decoder.1} parent=1 // pred_check
      _
    $region51: #{mlp_decoder.1} parent=1 // pred_check_branch
      %1940 = sbr.rel (0) target = $region53
    $region52: #{mlp_decoder.1} parent=1 // pred_region
      %1942 = vsyncadd [#allocation5], 0
      %s1944 = sshll.u32 [#allocation12], 4
      %s1945 = int_to_ptr.vmem [resolvable:$true] %s1944
      %s1946 = sshll.u32 %s7, 4
      %s1947 = int_to_ptr.hbm [resolvable:$true] %s1946
      %1949 = dma.vmem_to_hbm [thread:$0]  %s1945, 16, %s1947, [#allocation5]
    $region53: #{mlp_decoder.1} parent=1 // pred_fallthru
      _
    // Predicated region
    $region54: #{mlp_decoder.1} parent=1 // pred_check
      _
    $region55: #{mlp_decoder.1} parent=1 // pred_check_branch
      %1951 = sbr.rel (0) target = $region57
    $region56: #{mlp_decoder.1} parent=1 // pred_region
      %1953 = dma.done [#allocation5], 16
    $region57: #{mlp_decoder.1} parent=1 // pred_fallthru
      _
    %1954 = vsyncpa [#allocation4], 1
    %1955 = vsyncpa [#allocation7], 1
    %1956 = vsyncpa [#allocation10], 1
    %1957 = vsyncpa [#allocation5], 1

</llo_original>
